<compile_context>
chip_gen: v7x
topology: tpu7x:2x2x1
jax: 0.10.0
libtpu: 0.0.40
codegen_flags: <defaults>
</compile_context>

<pallas_src>
import functools

import jax
import jax.numpy as jnp
from jax.experimental import pallas as pl
from jax.experimental.pallas import tpu as pltpu

HIDDEN = 512                 # encoder output width (hard-coded in the module)
LATENT = (HIDDEN + 1) // 2   # = 256, GatedAttention latent width


def _mil_kernel(x_ref, mask_ref,
                wenc_ref, benc_ref,      # (F, 512), (1, 512)
                w1g_ref, b1g_ref,        # (512, 512) = [fc1 | gate], (1, 512)
                w2_ref, b2_ref,          # (256, 1), (1, 1)
                wh_ref, bh_ref,          # (512, n_out), (1, n_out)
                out_ref,                 # (tb, n_out)
                *, compute_dtype):
    tb, n, f = x_ref.shape
    hidden = wenc_ref.shape[1]
    latent = w2_ref.shape[0]

    # Flatten the bag tile so every matmul pushes tb*n rows into the MXU.
    x = x_ref[...].reshape(tb * n, f)

    # encoder: Linear(F, 512) + ReLU  (f32 accumulate, f32 elementwise math)
    emb = jnp.dot(x, wenc_ref[...], preferred_element_type=jnp.float32)
    emb = jnp.maximum(emb + benc_ref[...], 0.0)                    # (tb*n, 512) f32
    emb_c = emb.astype(compute_dtype)

    # gated attention: fc1 and gate fused into one 512-wide matmul, then split.
    tg = jnp.dot(emb_c, w1g_ref[...],
                 preferred_element_type=jnp.float32) + b1g_ref[...]
    t = jnp.tanh(tg[:, :latent])
    g = jax.nn.sigmoid(tg[:, latent:])
    attn = jnp.dot((t * g).astype(compute_dtype), w2_ref[...],
                   preferred_element_type=jnp.float32) + b2_ref[...]   # (tb*n, 1)

    # per-bag length-masked softmax over the instance axis (all f32).
    # mask_ref is 1.0 for valid instances, 0.0 for padding; exact torch
    # semantics: masked logits are set to -1e10 (lens==0 -> uniform weights).
    logits = attn.reshape(tb, n)
    logits = jnp.where(mask_ref[...] > 0.5, logits,
                       jnp.full_like(logits, -1e10))
    m = jnp.max(logits, axis=-1, keepdims=True)
    e = jnp.exp(logits - m)
    denom = jnp.sum(e, axis=-1, keepdims=True)
    scores = e * pl.reciprocal(denom, approx=True)                 # (tb, n)

    # attention-weighted pooling as a batched (1, n) @ (n, 512) matmul (MXU).
    emb_b = emb_c.reshape(tb, n, hidden)
    pooled = jnp.einsum('bqn,bnd->bqd',
                        scores.astype(compute_dtype).reshape(tb, 1, n), emb_b,
                        preferred_element_type=jnp.float32).reshape(tb, hidden)

    # head: Linear(512, n_out)
    out = jnp.dot(pooled.astype(compute_dtype), wh_ref[...],
                  preferred_element_type=jnp.float32) + bh_ref[...]
    out_ref[...] = out.astype(out_ref.dtype)


def _pick_bag_tile(B, N, F, itemsize):
    """Pick bags-per-step: divisor of B (and 8-aligned or ==B so BlockSpec
    sublane constraints hold), smallest that gives >=256 MXU rows, capped so
    the double-buffered bags block stays well inside VMEM."""
    budget = 8 * 1024 * 1024   # per-buffer budget for the (tb, N, F) block
    divs = [d for d in range(1, B + 1)
            if B % d == 0 and (d == B or d % 8 == 0)]
    fitting = [d for d in divs if d * N * F * itemsize <= budget] or divs[:1]
    for d in fitting:
        if d * N >= 256:
            return d
    return fitting[-1]


def mil_model(bags, lens, params, *, compute_dtype=jnp.bfloat16, bag_tile=None):
    """bags: (B, N, F) f32, lens: (B,) int32 -> scores (B, n_out) f32."""
    B, N, F = bags.shape
    n_out = params["wh"].shape[1]
    itemsize = jnp.dtype(compute_dtype).itemsize
    tb = bag_tile or _pick_bag_tile(B, N, F, itemsize)
    assert B % tb == 0, (B, tb)

    # Cast matmul operands to the compute dtype (bf16 halves MXU time and DMA
    # bytes); biases and all elementwise math stay f32.
    x = bags.astype(compute_dtype)
    wenc = params["wenc"].astype(compute_dtype)
    w1g = jnp.concatenate([params["w1"], params["wg"]], axis=1).astype(compute_dtype)
    b1g = jnp.concatenate([params["b1"], params["bg"]], axis=1)          # f32
    w2 = params["w2"].astype(compute_dtype)
    wh = params["wh"].astype(compute_dtype)

    # Validity mask (1.0 valid / 0.0 padded), built once outside the kernel.
    idx = jnp.arange(N, dtype=jnp.int32)[None, :]
    mask = (idx < lens[:, None]).astype(jnp.float32)                     # (B, N)

    full = lambda shape: pl.BlockSpec(shape, lambda i: (0,) * len(shape))

    kernel = functools.partial(_mil_kernel, compute_dtype=compute_dtype)
    out = pl.pallas_call(
        kernel,
        out_shape=jax.ShapeDtypeStruct((B, n_out), jnp.float32),
        grid=(B // tb,),
        in_specs=[
            pl.BlockSpec((tb, N, F), lambda i: (i, 0, 0)),   # bags tile
            pl.BlockSpec((tb, N), lambda i: (i, 0)),         # validity mask
            full((F, HIDDEN)), full((1, HIDDEN)),            # encoder
            full((HIDDEN, 2 * LATENT)), full((1, 2 * LATENT)),  # fc1 || gate
            full((LATENT, 1)), full((1, 1)),                 # fc2
            full((HIDDEN, n_out)), full((1, n_out)),         # head
        ],
        out_specs=pl.BlockSpec((tb, n_out), lambda i: (i, 0)),
        compiler_params=pltpu.CompilerParams(
            dimension_semantics=("parallel",)),
    )(x, mask, wenc, params["benc"], w1g, b1g, w2, params["b2"],
      wh, params["bh"])
    return out


def init_params(key, n_feats, n_out):
    ks = jax.random.split(key, 6)
    scale = 0.05
    return {
        "wenc": scale * jax.random.normal(ks[0], (n_feats, HIDDEN), jnp.float32),
        "benc": scale * jax.random.normal(ks[1], (1, HIDDEN), jnp.float32),
        "w1":   scale * jax.random.normal(ks[2], (HIDDEN, LATENT), jnp.float32),
        "b1":   jnp.zeros((1, LATENT), jnp.float32),
        "wg":   scale * jax.random.normal(ks[3], (HIDDEN, LATENT), jnp.float32),
        "bg":   jnp.zeros((1, LATENT), jnp.float32),
        "w2":   scale * jax.random.normal(ks[4], (LATENT, 1), jnp.float32),
        "b2":   jnp.zeros((1, 1), jnp.float32),
        "wh":   scale * jax.random.normal(ks[5], (HIDDEN, n_out), jnp.float32),
        "bh":   jnp.zeros((1, n_out), jnp.float32),
    }


def mil_model_ref(bags, lens, params):
    """Pure-JAX f32 reference mirroring the PyTorch forward."""
    emb = jnp.maximum(bags @ params["wenc"] + params["benc"][0], 0.0)     # (B,N,512)
    t = jnp.tanh(emb @ params["w1"] + params["b1"][0])
    g = jax.nn.sigmoid(emb @ params["wg"] + params["bg"][0])
    attn = (t * g) @ params["w2"] + params["b2"][0]                       # (B,N,1)
    idx = jnp.arange(bags.shape[1])[None, :, None]
    mask = idx < lens[:, None, None]
    masked = jnp.where(mask, attn, jnp.full_like(attn, -1e10))
    scores = jax.nn.softmax(masked, axis=1)
    pooled = jnp.sum(scores * emb, axis=-2)                               # (B,512)
    return pooled @ params["wh"] + params["bh"][0]


if __name__ == "__main__":
    B, N, n_feats, n_out = 2, 16, 128, 8
    key = jax.random.PRNGKey(0)
    k_x, k_p = jax.random.split(key)

    bags = jax.random.normal(k_x, (B, N, n_feats), jnp.float32)
    lens = jnp.array([12, 5], dtype=jnp.int32)     # bag lengths (<= N)
    params = init_params(k_p, n_feats, n_out)

    ref = mil_model_ref(bags, lens, params)

    # f32-matmul path: tight check against the reference.
    out_f32 = jax.block_until_ready(
        mil_model(bags, lens, params, compute_dtype=jnp.float32))
    assert out_f32.shape == (B, n_out)
    assert jnp.allclose(out_f32, ref, atol=5e-3, rtol=5e-3), (out_f32, ref)

    # bf16-matmul path (default, faster): looser tolerance for bf16 operands.
    out_bf16 = jax.block_until_ready(mil_model(bags, lens, params))
    assert out_bf16.shape == (B, n_out)
    rel = float(jnp.linalg.norm(out_bf16 - ref) / (jnp.linalg.norm(ref) + 1e-12))
    assert rel < 5e-2, rel

    print("KERNEL_OK")
</pallas_src>

<mosaic_0001>
module attributes {stable_mosaic.version = 11 : i64} {
  func.func @_mil_kernel(%arg0: i32, %arg1: memref<2x16x128xf32, #tpu.memory_space<vmem>>, %arg2: memref<2x16xf32, #tpu.memory_space<vmem>>, %arg3: memref<128x512xf32, #tpu.memory_space<vmem>>, %arg4: memref<1x512xf32, #tpu.memory_space<vmem>>, %arg5: memref<512x512xf32, #tpu.memory_space<vmem>>, %arg6: memref<1x512xf32, #tpu.memory_space<vmem>>, %arg7: memref<256x1xf32, #tpu.memory_space<vmem>>, %arg8: memref<1x1xf32, #tpu.memory_space<vmem>>, %arg9: memref<512x8xf32, #tpu.memory_space<vmem>>, %arg10: memref<1x8xf32, #tpu.memory_space<vmem>>, %arg11: memref<2x8xf32, #tpu.memory_space<vmem>>) attributes {dimension_semantics = [#tpu.dimension_semantics<parallel>], iteration_bounds = array<i64: 1>, scalar_prefetch = 0 : i64, scratch_operands = 0 : i64, tpu.core_type = #tpu.core_type<tc>, window_params = [{transform_indices = @transform_0, window_bounds = array<i64: 2, 16, 128>}, {transform_indices = @transform_1, window_bounds = array<i64: 2, 16>}, {pipeline_mode = #tpu.pipeline_mode<synchronous>, transform_indices = @transform_2, window_bounds = array<i64: 128, 512>}, {pipeline_mode = #tpu.pipeline_mode<synchronous>, transform_indices = @transform_3, window_bounds = array<i64: 1, 512>}, {pipeline_mode = #tpu.pipeline_mode<synchronous>, transform_indices = @transform_4, window_bounds = array<i64: 512, 512>}, {pipeline_mode = #tpu.pipeline_mode<synchronous>, transform_indices = @transform_5, window_bounds = array<i64: 1, 512>}, {pipeline_mode = #tpu.pipeline_mode<synchronous>, transform_indices = @transform_6, window_bounds = array<i64: 256, 1>}, {pipeline_mode = #tpu.pipeline_mode<synchronous>, transform_indices = @transform_7, window_bounds = array<i64: 1, 1>}, {pipeline_mode = #tpu.pipeline_mode<synchronous>, transform_indices = @transform_8, window_bounds = array<i64: 512, 8>}, {pipeline_mode = #tpu.pipeline_mode<synchronous>, transform_indices = @transform_9, window_bounds = array<i64: 1, 8>}, {transform_indices = @transform_10, window_bounds = array<i64: 2, 8>}]} {
    %c0 = arith.constant 0 : index
    %c0_0 = arith.constant 0 : index
    %c0_1 = arith.constant 0 : index
    %0 = vector.load %arg1[%c0, %c0_0, %c0_1] : memref<2x16x128xf32, #tpu.memory_space<vmem>>, vector<2x16x128xf32>
    %1 = vector.shape_cast %0 : vector<2x16x128xf32> to vector<32x128xf32>
    %c0_2 = arith.constant 0 : index
    %c0_3 = arith.constant 0 : index
    %2 = vector.load %arg3[%c0_2, %c0_3] : memref<128x512xf32, #tpu.memory_space<vmem>>, vector<128x512xf32>
    %cst = arith.constant dense<0.000000e+00> : vector<32x512xf32>
    %3 = tpu.matmul %1, %2, %cst {dimension_numbers = #tpu.dot_dimension_numbers<[1], [0], [0], [1], [0, 0, 1, 1], [], []>} : vector<32x128xf32>, vector<128x512xf32>, vector<32x512xf32> -> vector<32x512xf32>
    %c0_4 = arith.constant 0 : index
    %c0_5 = arith.constant 0 : index
    %4 = vector.load %arg4[%c0_4, %c0_5] : memref<1x512xf32, #tpu.memory_space<vmem>>, vector<1x512xf32>
    %5 = vector.broadcast %4 : vector<1x512xf32> to vector<32x512xf32>
    %6 = arith.addf %3, %5 : vector<32x512xf32>
    %cst_6 = arith.constant 0.000000e+00 : f32
    %7 = vector.broadcast %cst_6 : f32 to vector<32x512xf32>
    %8 = arith.maximumf %6, %7 : vector<32x512xf32>
    %c0_7 = arith.constant 0 : index
    %c0_8 = arith.constant 0 : index
    %9 = vector.load %arg5[%c0_7, %c0_8] : memref<512x512xf32, #tpu.memory_space<vmem>>, vector<512x512xf32>
    %cst_9 = arith.constant dense<0.000000e+00> : vector<32x512xf32>
    %10 = tpu.matmul %8, %9, %cst_9 {dimension_numbers = #tpu.dot_dimension_numbers<[1], [0], [0], [1], [0, 0, 1, 1], [], []>} : vector<32x512xf32>, vector<512x512xf32>, vector<32x512xf32> -> vector<32x512xf32>
    %c0_10 = arith.constant 0 : index
    %c0_11 = arith.constant 0 : index
    %11 = vector.load %arg6[%c0_10, %c0_11] : memref<1x512xf32, #tpu.memory_space<vmem>>, vector<1x512xf32>
    %12 = vector.broadcast %11 : vector<1x512xf32> to vector<32x512xf32>
    %13 = arith.addf %10, %12 : vector<32x512xf32>
    %14 = vector.extract_strided_slice %13 {offsets = [0, 0], sizes = [32, 256], strides = [1, 1]} : vector<32x512xf32> to vector<32x256xf32>
    %15 = math.tanh %14 : vector<32x256xf32>
    %16 = vector.extract_strided_slice %13 {offsets = [0, 256], sizes = [32, 256], strides = [1, 1]} : vector<32x512xf32> to vector<32x256xf32>
    %17 = arith.negf %16 : vector<32x256xf32>
    %18 = math.exp %17 : vector<32x256xf32>
    %cst_12 = arith.constant 1.000000e+00 : f32
    %19 = vector.broadcast %cst_12 : f32 to vector<32x256xf32>
    %20 = arith.addf %19, %18 : vector<32x256xf32>
    %21 = arith.divf %19, %20 : vector<32x256xf32>
    %22 = arith.mulf %15, %21 : vector<32x256xf32>
    %c0_13 = arith.constant 0 : index
    %c0_14 = arith.constant 0 : index
    %23 = vector.load %arg7[%c0_13, %c0_14] : memref<256x1xf32, #tpu.memory_space<vmem>>, vector<256x1xf32>
    %cst_15 = arith.constant dense<0.000000e+00> : vector<32x1xf32>
    %24 = tpu.matmul %22, %23, %cst_15 {dimension_numbers = #tpu.dot_dimension_numbers<[1], [0], [0], [1], [0, 0, 1, 1], [], []>} : vector<32x256xf32>, vector<256x1xf32>, vector<32x1xf32> -> vector<32x1xf32>
    %c0_16 = arith.constant 0 : index
    %c0_17 = arith.constant 0 : index
    %25 = vector.load %arg8[%c0_16, %c0_17] : memref<1x1xf32, #tpu.memory_space<vmem>>, vector<1x1xf32>
    %26 = vector.broadcast %25 : vector<1x1xf32> to vector<32x1xf32>
    %27 = arith.addf %24, %26 : vector<32x1xf32>
    %28 = vector.shape_cast %27 : vector<32x1xf32> to vector<2x16xf32>
    %c0_18 = arith.constant 0 : index
    %c0_19 = arith.constant 0 : index
    %29 = vector.load %arg2[%c0_18, %c0_19] : memref<2x16xf32, #tpu.memory_space<vmem>>, vector<2x16xf32>
    %cst_20 = arith.constant 5.000000e-01 : f32
    %30 = vector.broadcast %cst_20 : f32 to vector<2x16xf32>
    %31 = arith.cmpf ogt, %29, %30 : vector<2x16xf32>
    %cst_21 = arith.constant -1.000000e+10 : f32
    %32 = vector.broadcast %cst_21 : f32 to vector<2x16xf32>
    %33 = arith.select %31, %28, %32 : vector<2x16xi1>, vector<2x16xf32>
    %cst_22 = arith.constant dense<0xFF800000> : vector<2xf32>
    %34 = vector.multi_reduction <maximumf>, %33, %cst_22 [1] : vector<2x16xf32> to vector<2xf32>
    %35 = vector.shape_cast %34 : vector<2xf32> to vector<2x1xf32>
    %36 = vector.broadcast %35 : vector<2x1xf32> to vector<2x16xf32>
    %37 = arith.subf %33, %36 : vector<2x16xf32>
    %38 = math.exp %37 : vector<2x16xf32>
    %cst_23 = arith.constant dense<0.000000e+00> : vector<2xf32>
    %39 = vector.multi_reduction <add>, %38, %cst_23 [1] : vector<2x16xf32> to vector<2xf32>
    %40 = vector.shape_cast %39 : vector<2xf32> to vector<2x1xf32>
    %41 = tpu.reciprocal %40 {approx = true} : vector<2x1xf32> -> vector<2x1xf32>
    %42 = vector.broadcast %41 : vector<2x1xf32> to vector<2x16xf32>
    %43 = arith.mulf %38, %42 : vector<2x16xf32>
    %44 = vector.shape_cast %8 : vector<32x512xf32> to vector<2x16x512xf32>
    %45 = vector.shape_cast %43 : vector<2x16xf32> to vector<2x1x16xf32>
    "tpu.trace_start"() <{level = 10 : i32, message = "bqn,bnd->bqd"}> : () -> ()
    %cst_24 = arith.constant dense<0.000000e+00> : vector<2x1x512xf32>
    %46 = tpu.matmul %45, %44, %cst_24 {dimension_numbers = #tpu.dot_dimension_numbers<[2], [1], [1], [2], [0, 0, 0, 1, 1, 2], [0], [0]>} : vector<2x1x16xf32>, vector<2x16x512xf32>, vector<2x1x512xf32> -> vector<2x1x512xf32>
    "tpu.trace_stop"() : () -> ()
    %47 = vector.shape_cast %46 : vector<2x1x512xf32> to vector<2x512xf32>
    %c0_25 = arith.constant 0 : index
    %c0_26 = arith.constant 0 : index
    %48 = vector.load %arg9[%c0_25, %c0_26] : memref<512x8xf32, #tpu.memory_space<vmem>>, vector<512x8xf32>
    %cst_27 = arith.constant dense<0.000000e+00> : vector<2x8xf32>
    %49 = tpu.matmul %47, %48, %cst_27 {dimension_numbers = #tpu.dot_dimension_numbers<[1], [0], [0], [1], [0, 0, 1, 1], [], []>} : vector<2x512xf32>, vector<512x8xf32>, vector<2x8xf32> -> vector<2x8xf32>
    %c0_28 = arith.constant 0 : index
    %c0_29 = arith.constant 0 : index
    %50 = vector.load %arg10[%c0_28, %c0_29] : memref<1x8xf32, #tpu.memory_space<vmem>>, vector<1x8xf32>
    %51 = vector.broadcast %50 : vector<1x8xf32> to vector<2x8xf32>
    %52 = arith.addf %49, %51 : vector<2x8xf32>
    %c0_30 = arith.constant 0 : index
    %c0_31 = arith.constant 0 : index
    %53 = vector.load %arg11[%c0_30, %c0_31] : memref<2x8xf32, #tpu.memory_space<vmem>>, vector<2x8xf32>
    tpu.vector_store %arg11[%c0_30, %c0_31], %52 {strides = array<i32>} : memref<2x8xf32, #tpu.memory_space<vmem>>, vector<2x8xf32>,
    return
  }
  func.func @transform_0(%arg0: i32) -> (i32, i32, i32) {
    %c0_i32 = arith.constant 0 : i32
    %c0_i32_0 = arith.constant 0 : i32
    %c0_i32_1 = arith.constant 0 : i32
    return %arg0, %c0_i32, %c0_i32_0 : i32, i32, i32
  }
  func.func @transform_1(%arg0: i32) -> (i32, i32) {
    %c0_i32 = arith.constant 0 : i32
    %c0_i32_0 = arith.constant 0 : i32
    return %arg0, %c0_i32 : i32, i32
  }
  func.func @transform_2(%arg0: i32) -> (i32, i32) {
    %c0_i32 = arith.constant 0 : i32
    %c0_i32_0 = arith.constant 0 : i32
    %c0_i32_1 = arith.constant 0 : i32
    return %c0_i32, %c0_i32_0 : i32, i32
  }
  func.func @transform_3(%arg0: i32) -> (i32, i32) {
    %c0_i32 = arith.constant 0 : i32
    %c0_i32_0 = arith.constant 0 : i32
    %c0_i32_1 = arith.constant 0 : i32
    return %c0_i32, %c0_i32_0 : i32, i32
  }
  func.func @transform_4(%arg0: i32) -> (i32, i32) {
    %c0_i32 = arith.constant 0 : i32
    %c0_i32_0 = arith.constant 0 : i32
    %c0_i32_1 = arith.constant 0 : i32
    return %c0_i32, %c0_i32_0 : i32, i32
  }
  func.func @transform_5(%arg0: i32) -> (i32, i32) {
    %c0_i32 = arith.constant 0 : i32
    %c0_i32_0 = arith.constant 0 : i32
    %c0_i32_1 = arith.constant 0 : i32
    return %c0_i32, %c0_i32_0 : i32, i32
  }
  func.func @transform_6(%arg0: i32) -> (i32, i32) {
    %c0_i32 = arith.constant 0 : i32
    %c0_i32_0 = arith.constant 0 : i32
    %c0_i32_1 = arith.constant 0 : i32
    return %c0_i32, %c0_i32_0 : i32, i32
  }
  func.func @transform_7(%arg0: i32) -> (i32, i32) {
    %c0_i32 = arith.constant 0 : i32
    %c0_i32_0 = arith.constant 0 : i32
    %c0_i32_1 = arith.constant 0 : i32
    return %c0_i32, %c0_i32_0 : i32, i32
  }
  func.func @transform_8(%arg0: i32) -> (i32, i32) {
    %c0_i32 = arith.constant 0 : i32
    %c0_i32_0 = arith.constant 0 : i32
    %c0_i32_1 = arith.constant 0 : i32
    return %c0_i32, %c0_i32_0 : i32, i32
  }
  func.func @transform_9(%arg0: i32) -> (i32, i32) {
    %c0_i32 = arith.constant 0 : i32
    %c0_i32_0 = arith.constant 0 : i32
    %c0_i32_1 = arith.constant 0 : i32
    return %c0_i32, %c0_i32_0 : i32, i32
  }
  func.func @transform_10(%arg0: i32) -> (i32, i32) {
    %c0_i32 = arith.constant 0 : i32
    %c0_i32_0 = arith.constant 0 : i32
    return %arg0, %c0_i32 : i32, i32
  }
}

</mosaic_0001>

<llo_original>
// kernel: tpu_custom_call.1
$region0: #{tpu_custom_call.1}
  #allocation0 [shape = 'u32[]', space=smem, size = 0x4, offset = 0x4, fixed_abs, tag = 'smem constant byte address 0x4 - core index']
  #allocation1 [shape = 'u32[144,128]{1,0:T(1,128)}', space=vmem, size = 0x12000, scoped, tag = 'internal scratch']
  #allocation2 [shape = 'f32[1,1]{1,0:T(1,128)S(1)}', space=vmem, size = 0x200, scoped, tag = 'scoped memory for tpu_custom_call.1']
  %s0 = inlined_call_operand.vmem [shape: f32[2,16,128], index: 0, kind: input, shape index: {}]
  %s1 = inlined_call_operand.vmem [shape: f32[2,16], index: 1, kind: input, shape index: {}]
  %s2 = inlined_call_operand.vmem [shape: f32[128,512], index: 2, kind: input, shape index: {}]
  %s3 = inlined_call_operand.vmem [shape: f32[1,512], index: 3, kind: input, shape index: {}]
  %s4 = inlined_call_operand.hbm [shape: f32[512,512], index: 4, kind: input, shape index: {}]
  %s5 = inlined_call_operand.vmem [shape: f32[1,512], index: 5, kind: input, shape index: {}]
  %s6 = inlined_call_operand.vmem [shape: f32[256,1], index: 6, kind: input, shape index: {}]
  %s7 = inlined_call_operand.<no memory space> [shape: f32[1,1], index: 7, kind: input, shape index: {}]
  %s8 = inlined_call_operand.vmem [shape: f32[512,8], index: 8, kind: input, shape index: {}]
  %s9 = inlined_call_operand.vmem [shape: f32[1,8], index: 9, kind: input, shape index: {}]
  %s10 = inlined_call_operand.hbm [shape: f32[2,8], index: 10, kind: output, shape index: {}]
  %s11 = sld [smem:[#allocation0]]
  $region54: #{tpu_custom_call.1} parent=0
    _
  %s13 = ssub.s32 1, %s11
  %s14 = scalar_select 0, %s13, %s11
  %v15 = vstv %s7
  %16 = vst [vmem:[#allocation2] sm:$0x1] %v15
  $region1: #{tpu_custom_call.1} parent=0
    #allocation3 [shape = 'u8[1048576]{0}', space=vmem, size = 0x100000, scoped, tag = 'input window, operand 4, single buffered']
    #allocation4 [shape = 's32[1]{0}', space=sflag, size = 0x4, scoped, tag = 'scoped memory for tpu_custom_call.1']
    #allocation5 [shape = 's32[1]{0}', space=sflag, size = 0x4, scoped, tag = 'scoped memory for tpu_custom_call.1']
    #allocation6 [shape = 'u8[1024]{0}', space=vmem, size = 0x400, scoped, tag = 'output window, operand 0, single buffered']
    %17 = vsyncpa [#allocation4], 0
    %18 = vsyncpa [#allocation5], 0
    // Predicated region
    $region2: #{tpu_custom_call.1} parent=1 // pred_check
      _
    $region3: #{tpu_custom_call.1} parent=1 // pred_check_branch
      %20 = sbr.rel (0) target = $region5
    $region4: #{tpu_custom_call.1} parent=1 // pred_region
      _
    $region5: #{tpu_custom_call.1} parent=1 // pred_fallthru
      _
    // Predicated region
    $region6: #{tpu_custom_call.1} parent=1 // pred_check
      _
    $region7: #{tpu_custom_call.1} parent=1 // pred_check_branch
      %22 = sbr.rel (0) target = $region9
    $region8: #{tpu_custom_call.1} parent=1 // pred_region
      _
    $region9: #{tpu_custom_call.1} parent=1 // pred_fallthru
      _
    // Predicated region
    $region10: #{tpu_custom_call.1} parent=1 // pred_check
      _
    $region11: #{tpu_custom_call.1} parent=1 // pred_check_branch
      %24 = sbr.rel (0) target = $region13
    $region12: #{tpu_custom_call.1} parent=1 // pred_region
      _
    $region13: #{tpu_custom_call.1} parent=1 // pred_fallthru
      _
    // Predicated region
    $region14: #{tpu_custom_call.1} parent=1 // pred_check
      _
    $region15: #{tpu_custom_call.1} parent=1 // pred_check_branch
      %26 = sbr.rel (0) target = $region17
    $region16: #{tpu_custom_call.1} parent=1 // pred_region
      _
    $region17: #{tpu_custom_call.1} parent=1 // pred_fallthru
      _
    // Predicated region
    $region18: #{tpu_custom_call.1} parent=1 // pred_check
      _
    $region19: #{tpu_custom_call.1} parent=1 // pred_check_branch
      %28 = sbr.rel (0) target = $region21
    $region20: #{tpu_custom_call.1} parent=1 // pred_region
      %s30 = ssub.s32 32768, 32768
      %31 = vsyncadd [#allocation4], %s30
      %s32 = sshll.u32 [#allocation3], 4
      %s33 = int_to_ptr.vmem [resolvable:$true] %s32
      %38 = dma.hbm_to_vmem [thread:$0]  %s4, 32768, %s33, [#allocation4], 512, 512, 32
    $region21: #{tpu_custom_call.1} parent=1 // pred_fallthru
      _
    // Predicated region
    $region22: #{tpu_custom_call.1} parent=1 // pred_check
      _
    $region23: #{tpu_custom_call.1} parent=1 // pred_check_branch
      %40 = sbr.rel (0) target = $region25
    $region24: #{tpu_custom_call.1} parent=1 // pred_region
      _
    $region25: #{tpu_custom_call.1} parent=1 // pred_fallthru
      _
    // Predicated region
    $region26: #{tpu_custom_call.1} parent=1 // pred_check
      _
    $region27: #{tpu_custom_call.1} parent=1 // pred_check_branch
      %42 = sbr.rel (0) target = $region29
    $region28: #{tpu_custom_call.1} parent=1 // pred_region
      _
    $region29: #{tpu_custom_call.1} parent=1 // pred_fallthru
      _
    // Predicated region
    $region30: #{tpu_custom_call.1} parent=1 // pred_check
      _
    $region31: #{tpu_custom_call.1} parent=1 // pred_check_branch
      %44 = sbr.rel (0) target = $region33
    $region32: #{tpu_custom_call.1} parent=1 // pred_region
      _
    $region33: #{tpu_custom_call.1} parent=1 // pred_fallthru
      _
    // Predicated region
    $region34: #{tpu_custom_call.1} parent=1 // pred_check
      _
    $region35: #{tpu_custom_call.1} parent=1 // pred_check_branch
      %46 = sbr.rel (0) target = $region37
    $region36: #{tpu_custom_call.1} parent=1 // pred_region
      _
    $region37: #{tpu_custom_call.1} parent=1 // pred_fallthru
      _
    // Predicated region
    $region38: #{tpu_custom_call.1} parent=1 // pred_check
      _
    $region39: #{tpu_custom_call.1} parent=1 // pred_check_branch
      %48 = sbr.rel (0) target = $region41
    $region40: #{tpu_custom_call.1} parent=1 // pred_region
      _
    $region41: #{tpu_custom_call.1} parent=1 // pred_fallthru
      _
    // Predicated region
    $region42: #{tpu_custom_call.1} parent=1 // pred_check
      _
    $region43: #{tpu_custom_call.1} parent=1 // pred_check_branch
      %50 = sbr.rel (0) target = $region45
    $region44: #{tpu_custom_call.1} parent=1 // pred_region
      %51 = dma.done [#allocation4], 32768
    $region45: #{tpu_custom_call.1} parent=1 // pred_fallthru
      _
    %v52 = vld [vmem:[%s0] sm:$0xff]
    %v53 = vld [vmem:[%s0 + $0x8] sm:$0xff]
    %v54 = vld [vmem:[%s0 + $0x10] sm:$0xff]
    %v55 = vld [vmem:[%s0 + $0x18] sm:$0xff]
    %v56 = vld [vmem:[%s2] sm:$0xff]
    %v57 = vld [vmem:[%s2 + $0x8] sm:$0xff]
    %v58 = vld [vmem:[%s2 + $0x10] sm:$0xff]
    %v59 = vld [vmem:[%s2 + $0x18] sm:$0xff]
    %v60 = vld [vmem:[%s2 + $0x20] sm:$0xff]
    %v61 = vld [vmem:[%s2 + $0x28] sm:$0xff]
    %v62 = vld [vmem:[%s2 + $0x30] sm:$0xff]
    %v63 = vld [vmem:[%s2 + $0x38] sm:$0xff]
    %v64 = vld [vmem:[%s2 + $0x40] sm:$0xff]
    %v65 = vld [vmem:[%s2 + $0x48] sm:$0xff]
    %v66 = vld [vmem:[%s2 + $0x50] sm:$0xff]
    %v67 = vld [vmem:[%s2 + $0x58] sm:$0xff]
    %v68 = vld [vmem:[%s2 + $0x60] sm:$0xff]
    %v69 = vld [vmem:[%s2 + $0x68] sm:$0xff]
    %v70 = vld [vmem:[%s2 + $0x70] sm:$0xff]
    %v71 = vld [vmem:[%s2 + $0x78] sm:$0xff]
    %v72 = vld [vmem:[%s2 + $0x80] sm:$0xff]
    %v73 = vld [vmem:[%s2 + $0x88] sm:$0xff]
    %v74 = vld [vmem:[%s2 + $0x90] sm:$0xff]
    %v75 = vld [vmem:[%s2 + $0x98] sm:$0xff]
    %v76 = vld [vmem:[%s2 + $0xa0] sm:$0xff]
    %v77 = vld [vmem:[%s2 + $0xa8] sm:$0xff]
    %v78 = vld [vmem:[%s2 + $0xb0] sm:$0xff]
    %v79 = vld [vmem:[%s2 + $0xb8] sm:$0xff]
    %v80 = vld [vmem:[%s2 + $0xc0] sm:$0xff]
    %v81 = vld [vmem:[%s2 + $0xc8] sm:$0xff]
    %v82 = vld [vmem:[%s2 + $0xd0] sm:$0xff]
    %v83 = vld [vmem:[%s2 + $0xd8] sm:$0xff]
    %v84 = vld [vmem:[%s2 + $0xe0] sm:$0xff]
    %v85 = vld [vmem:[%s2 + $0xe8] sm:$0xff]
    %v86 = vld [vmem:[%s2 + $0xf0] sm:$0xff]
    %v87 = vld [vmem:[%s2 + $0xf8] sm:$0xff]
    %v88 = vld [vmem:[%s2 + $0x100] sm:$0xff]
    %v89 = vld [vmem:[%s2 + $0x108] sm:$0xff]
    %v90 = vld [vmem:[%s2 + $0x110] sm:$0xff]
    %v91 = vld [vmem:[%s2 + $0x118] sm:$0xff]
    %v92 = vld [vmem:[%s2 + $0x120] sm:$0xff]
    %v93 = vld [vmem:[%s2 + $0x128] sm:$0xff]
    %v94 = vld [vmem:[%s2 + $0x130] sm:$0xff]
    %v95 = vld [vmem:[%s2 + $0x138] sm:$0xff]
    %v96 = vld [vmem:[%s2 + $0x140] sm:$0xff]
    %v97 = vld [vmem:[%s2 + $0x148] sm:$0xff]
    %v98 = vld [vmem:[%s2 + $0x150] sm:$0xff]
    %v99 = vld [vmem:[%s2 + $0x158] sm:$0xff]
    %v100 = vld [vmem:[%s2 + $0x160] sm:$0xff]
    %v101 = vld [vmem:[%s2 + $0x168] sm:$0xff]
    %v102 = vld [vmem:[%s2 + $0x170] sm:$0xff]
    %v103 = vld [vmem:[%s2 + $0x178] sm:$0xff]
    %v104 = vld [vmem:[%s2 + $0x180] sm:$0xff]
    %v105 = vld [vmem:[%s2 + $0x188] sm:$0xff]
    %v106 = vld [vmem:[%s2 + $0x190] sm:$0xff]
    %v107 = vld [vmem:[%s2 + $0x198] sm:$0xff]
    %v108 = vld [vmem:[%s2 + $0x1a0] sm:$0xff]
    %v109 = vld [vmem:[%s2 + $0x1a8] sm:$0xff]
    %v110 = vld [vmem:[%s2 + $0x1b0] sm:$0xff]
    %v111 = vld [vmem:[%s2 + $0x1b8] sm:$0xff]
    %v112 = vld [vmem:[%s2 + $0x1c0] sm:$0xff]
    %v113 = vld [vmem:[%s2 + $0x1c8] sm:$0xff]
    %v114 = vld [vmem:[%s2 + $0x1d0] sm:$0xff]
    %v115 = vld [vmem:[%s2 + $0x1d8] sm:$0xff]
    %v116 = vld [vmem:[%s2 + $0x1e0] sm:$0xff]
    %v117 = vld [vmem:[%s2 + $0x1e8] sm:$0xff]
    %v118 = vld [vmem:[%s2 + $0x1f0] sm:$0xff]
    %v119 = vld [vmem:[%s2 + $0x1f8] sm:$0xff]
    %v120 = vld [vmem:[%s3] sm:$0xf]
    %v122 = vlaneseq
    %v123 = vshrl.u32 %v122, 7
    %v124 = vsub.s32 0, %v123
    %v125 = vrot.slane %v120, %v124
    %v126 = vlaneseq
    %v127 = vshrl.u32 %v126, 7
    %v128 = vsub.s32 1, %v127
    %v129 = vrot.slane %v120, %v128
    %v130 = vlaneseq
    %v131 = vshrl.u32 %v130, 7
    %v132 = vsub.s32 2, %v131
    %v133 = vrot.slane %v120, %v132
    %v134 = vlaneseq
    %v135 = vshrl.u32 %v134, 7
    %v136 = vsub.s32 3, %v135
    %v137 = vrot.slane %v120, %v136
    %142 = vmatprep.subr.mxu0 %v57
    %143 = vmatpush1.msra.mxu0 %v56
    %144 = vmatprep.subr.mxu0 %v61
    %145 = vmatpush1.msra.mxu0 %v60
    %146 = vmatprep.subr.mxu0 %v65
    %147 = vmatpush1.msra.mxu0 %v64
    %148 = vmatprep.subr.mxu0 %v69
    %149 = vmatpush1.msra.mxu0 %v68
    %150 = vmatprep.subr.mxu0 %v73
    %151 = vmatpush1.msra.mxu0 %v72
    %152 = vmatprep.subr.mxu0 %v77
    %153 = vmatpush1.msra.mxu0 %v76
    %154 = vmatprep.subr.mxu0 %v81
    %155 = vmatpush1.msra.mxu0 %v80
    %156 = vmatprep.subr.mxu0 %v85
    %157 = vmatpush1.msra.mxu0 %v84
    %158 = vmatprep.subr.mxu0 %v89
    %159 = vmatpush1.msra.mxu0 %v88
    %160 = vmatprep.subr.mxu0 %v93
    %161 = vmatpush1.msra.mxu0 %v92
    %162 = vmatprep.subr.mxu0 %v97
    %163 = vmatpush1.msra.mxu0 %v96
    %164 = vmatprep.subr.mxu0 %v101
    %165 = vmatpush1.msra.mxu0 %v100
    %166 = vmatprep.subr.mxu0 %v105
    %167 = vmatpush1.msra.mxu0 %v104
    %168 = vmatprep.subr.mxu0 %v109
    %169 = vmatpush1.msra.mxu0 %v108
    %170 = vmatprep.subr.mxu0 %v113
    %171 = vmatpush1.msra.mxu0 %v112
    %172 = vmatprep.subr.mxu0 %v117
    %173 = vmatpush1.msra.mxu0 %v116
    %174 = vmatprep.subr.mxu0 0.0
    %175 = vmatpush1.msra.mxu0 0.0
    %176 = vmatprep.subr.mxu0 0.0
    %177 = vmatpush1.msra.mxu0 0.0
    %178 = vmatprep.subr.mxu0 0.0
    %179 = vmatpush1.msra.mxu0 0.0
    %180 = vmatprep.subr.mxu0 0.0
    %181 = vmatpush1.msra.mxu0 0.0
    %182 = vmatprep.subr.mxu0 0.0
    %183 = vmatpush1.msra.mxu0 0.0
    %184 = vmatprep.subr.mxu0 0.0
    %185 = vmatpush1.msra.mxu0 0.0
    %186 = vmatprep.subr.mxu0 0.0
    %187 = vmatpush1.msra.mxu0 0.0
    %188 = vmatprep.subr.mxu0 0.0
    %189 = vmatpush1.msra.mxu0 0.0
    %190 = vmatprep.subr.mxu0 0.0
    %191 = vmatpush1.msra.mxu0 0.0
    %192 = vmatprep.subr.mxu0 0.0
    %193 = vmatpush1.msra.mxu0 0.0
    %194 = vmatprep.subr.mxu0 0.0
    %195 = vmatpush1.msra.mxu0 0.0
    %196 = vmatprep.subr.mxu0 0.0
    %197 = vmatpush1.msra.mxu0 0.0
    %198 = vmatprep.subr.mxu0 0.0
    %199 = vmatpush1.msra.mxu0 0.0
    %200 = vmatprep.subr.mxu0 0.0
    %201 = vmatpush1.msra.mxu0 0.0
    %202 = vmatprep.subr.mxu0 0.0
    %203 = vmatpush1.msra.mxu0 0.0
    %204 = vmatprep.subr.mxu0 0.0
    %205 = vmatpush1.msra.mxu0 0.0
    %206 = vmatprep.mubr.f32.mxu0 0.0
    %207 = vmatmul.mubr.f32.gmra.mrb[0].mxu0 %v52
    %v208 = vpop.f32.mrb[0].mxu0
    %v209 = vadd.f32 %v125, %v208
    %v210 = vpop.f32.mrb[0].mxu0
    %v211 = vadd.f32 %v129, %v210
    %212 = vmatprep.mubr.f32.mxu0 0.0
    %213 = vmatmul.mubr.f32.gmra.mrb[0].mxu0 %v53
    %v214 = vpop.f32.mrb[0].mxu0
    %v215 = vadd.f32 %v125, %v214
    %v216 = vpop.f32.mrb[0].mxu0
    %v217 = vadd.f32 %v129, %v216
    %218 = vmatprep.mubr.f32.mxu0 0.0
    %219 = vmatmul.mubr.f32.gmra.mrb[0].mxu0 %v54
    %v220 = vpop.f32.mrb[0].mxu0
    %v221 = vadd.f32 %v125, %v220
    %v222 = vpop.f32.mrb[0].mxu0
    %v223 = vadd.f32 %v129, %v222
    %224 = vmatprep.mubr.f32.mxu0 0.0
    %225 = vmatmul.mubr.f32.gmra.mrb[0].mxu0 %v55
    %v226 = vpop.f32.mrb[0].mxu0
    %v227 = vadd.f32 %v125, %v226
    %v228 = vpop.f32.mrb[0].mxu0
    %v229 = vadd.f32 %v129, %v228
    %230 = vdwg.mxu0
    %231 = vmatprep.subr.mxu0 %v59
    %232 = vmatpush1.msra.mxu0 %v58
    %233 = vmatprep.subr.mxu0 %v63
    %234 = vmatpush1.msra.mxu0 %v62
    %235 = vmatprep.subr.mxu0 %v67
    %236 = vmatpush1.msra.mxu0 %v66
    %237 = vmatprep.subr.mxu0 %v71
    %238 = vmatpush1.msra.mxu0 %v70
    %239 = vmatprep.subr.mxu0 %v75
    %240 = vmatpush1.msra.mxu0 %v74
    %241 = vmatprep.subr.mxu0 %v79
    %242 = vmatpush1.msra.mxu0 %v78
    %243 = vmatprep.subr.mxu0 %v83
    %244 = vmatpush1.msra.mxu0 %v82
    %245 = vmatprep.subr.mxu0 %v87
    %246 = vmatpush1.msra.mxu0 %v86
    %247 = vmatprep.subr.mxu0 %v91
    %248 = vmatpush1.msra.mxu0 %v90
    %249 = vmatprep.subr.mxu0 %v95
    %250 = vmatpush1.msra.mxu0 %v94
    %251 = vmatprep.subr.mxu0 %v99
    %252 = vmatpush1.msra.mxu0 %v98
    %253 = vmatprep.subr.mxu0 %v103
    %254 = vmatpush1.msra.mxu0 %v102
    %255 = vmatprep.subr.mxu0 %v107
    %256 = vmatpush1.msra.mxu0 %v106
    %257 = vmatprep.subr.mxu0 %v111
    %258 = vmatpush1.msra.mxu0 %v110
    %259 = vmatprep.subr.mxu0 %v115
    %260 = vmatpush1.msra.mxu0 %v114
    %261 = vmatprep.subr.mxu0 %v119
    %262 = vmatpush1.msra.mxu0 %v118
    %263 = vmatprep.subr.mxu0 0.0
    %264 = vmatpush1.msra.mxu0 0.0
    %265 = vmatprep.subr.mxu0 0.0
    %266 = vmatpush1.msra.mxu0 0.0
    %267 = vmatprep.subr.mxu0 0.0
    %268 = vmatpush1.msra.mxu0 0.0
    %269 = vmatprep.subr.mxu0 0.0
    %270 = vmatpush1.msra.mxu0 0.0
    %271 = vmatprep.subr.mxu0 0.0
    %272 = vmatpush1.msra.mxu0 0.0
    %273 = vmatprep.subr.mxu0 0.0
    %274 = vmatpush1.msra.mxu0 0.0
    %275 = vmatprep.subr.mxu0 0.0
    %276 = vmatpush1.msra.mxu0 0.0
    %277 = vmatprep.subr.mxu0 0.0
    %278 = vmatpush1.msra.mxu0 0.0
    %279 = vmatprep.subr.mxu0 0.0
    %280 = vmatpush1.msra.mxu0 0.0
    %281 = vmatprep.subr.mxu0 0.0
    %282 = vmatpush1.msra.mxu0 0.0
    %283 = vmatprep.subr.mxu0 0.0
    %284 = vmatpush1.msra.mxu0 0.0
    %285 = vmatprep.subr.mxu0 0.0
    %286 = vmatpush1.msra.mxu0 0.0
    %287 = vmatprep.subr.mxu0 0.0
    %288 = vmatpush1.msra.mxu0 0.0
    %289 = vmatprep.subr.mxu0 0.0
    %290 = vmatpush1.msra.mxu0 0.0
    %291 = vmatprep.subr.mxu0 0.0
    %292 = vmatpush1.msra.mxu0 0.0
    %293 = vmatprep.subr.mxu0 0.0
    %294 = vmatpush1.msra.mxu0 0.0
    %295 = vmatprep.mubr.f32.mxu0 0.0
    %296 = vmatmul.mubr.f32.gmra.mrb[0].mxu0 %v52
    %v297 = vpop.f32.mrb[0].mxu0
    %v298 = vadd.f32 %v133, %v297
    %v299 = vpop.f32.mrb[0].mxu0
    %v300 = vadd.f32 %v137, %v299
    %301 = vmatprep.mubr.f32.mxu0 0.0
    %302 = vmatmul.mubr.f32.gmra.mrb[0].mxu0 %v53
    %v303 = vpop.f32.mrb[0].mxu0
    %v304 = vadd.f32 %v133, %v303
    %v305 = vpop.f32.mrb[0].mxu0
    %v306 = vadd.f32 %v137, %v305
    %307 = vmatprep.mubr.f32.mxu0 0.0
    %308 = vmatmul.mubr.f32.gmra.mrb[0].mxu0 %v54
    %v309 = vpop.f32.mrb[0].mxu0
    %v310 = vadd.f32 %v133, %v309
    %v311 = vpop.f32.mrb[0].mxu0
    %v312 = vadd.f32 %v137, %v311
    %313 = vmatprep.mubr.f32.mxu0 0.0
    %314 = vmatmul.mubr.f32.gmra.mrb[0].mxu0 %v55
    %v315 = vpop.f32.mrb[0].mxu0
    %v316 = vadd.f32 %v133, %v315
    %v317 = vpop.f32.mrb[0].mxu0
    %v318 = vadd.f32 %v137, %v317
    %319 = vdwg.mxu0
    %v320 = vmax.f32 %v209, 0.0
    %v321 = vmax.f32 %v211, 0.0
    %v322 = vmax.f32 %v298, 0.0
    %v323 = vmax.f32 %v300, 0.0
    %v324 = vmax.f32 %v215, 0.0
    %v325 = vmax.f32 %v217, 0.0
    %v326 = vmax.f32 %v304, 0.0
    %v327 = vmax.f32 %v306, 0.0
    %v328 = vmax.f32 %v221, 0.0
    %v329 = vmax.f32 %v223, 0.0
    %v330 = vmax.f32 %v310, 0.0
    %v331 = vmax.f32 %v312, 0.0
    %v332 = vmax.f32 %v227, 0.0
    %v333 = vmax.f32 %v229, 0.0
    %v334 = vmax.f32 %v316, 0.0
    %v335 = vmax.f32 %v318, 0.0
    %v336 = vld [vmem:[#allocation3] sm:$0xff]
    %v337 = vld [vmem:[#allocation3 + $0x8] sm:$0xff]
    %v338 = vld [vmem:[#allocation3 + $0x10] sm:$0xff]
    %v339 = vld [vmem:[#allocation3 + $0x18] sm:$0xff]
    %v340 = vld [vmem:[#allocation3 + $0x20] sm:$0xff]
    %v341 = vld [vmem:[#allocation3 + $0x28] sm:$0xff]
    %v342 = vld [vmem:[#allocation3 + $0x30] sm:$0xff]
    %v343 = vld [vmem:[#allocation3 + $0x38] sm:$0xff]
    %v344 = vld [vmem:[#allocation3 + $0x40] sm:$0xff]
    %v345 = vld [vmem:[#allocation3 + $0x48] sm:$0xff]
    %v346 = vld [vmem:[#allocation3 + $0x50] sm:$0xff]
    %v347 = vld [vmem:[#allocation3 + $0x58] sm:$0xff]
    %v348 = vld [vmem:[#allocation3 + $0x60] sm:$0xff]
    %v349 = vld [vmem:[#allocation3 + $0x68] sm:$0xff]
    %v350 = vld [vmem:[#allocation3 + $0x70] sm:$0xff]
    %v351 = vld [vmem:[#allocation3 + $0x78] sm:$0xff]
    %v352 = vld [vmem:[#allocation3 + $0x80] sm:$0xff]
    %v353 = vld [vmem:[#allocation3 + $0x88] sm:$0xff]
    %v354 = vld [vmem:[#allocation3 + $0x90] sm:$0xff]
    %v355 = vld [vmem:[#allocation3 + $0x98] sm:$0xff]
    %v356 = vld [vmem:[#allocation3 + $0xa0] sm:$0xff]
    %v357 = vld [vmem:[#allocation3 + $0xa8] sm:$0xff]
    %v358 = vld [vmem:[#allocation3 + $0xb0] sm:$0xff]
    %v359 = vld [vmem:[#allocation3 + $0xb8] sm:$0xff]
    %v360 = vld [vmem:[#allocation3 + $0xc0] sm:$0xff]
    %v361 = vld [vmem:[#allocation3 + $0xc8] sm:$0xff]
    %v362 = vld [vmem:[#allocation3 + $0xd0] sm:$0xff]
    %v363 = vld [vmem:[#allocation3 + $0xd8] sm:$0xff]
    %v364 = vld [vmem:[#allocation3 + $0xe0] sm:$0xff]
    %v365 = vld [vmem:[#allocation3 + $0xe8] sm:$0xff]
    %v366 = vld [vmem:[#allocation3 + $0xf0] sm:$0xff]
    %v367 = vld [vmem:[#allocation3 + $0xf8] sm:$0xff]
    %v368 = vld [vmem:[#allocation3 + $0x100] sm:$0xff]
    %v369 = vld [vmem:[#allocation3 + $0x108] sm:$0xff]
    %v370 = vld [vmem:[#allocation3 + $0x110] sm:$0xff]
    %v371 = vld [vmem:[#allocation3 + $0x118] sm:$0xff]
    %v372 = vld [vmem:[#allocation3 + $0x120] sm:$0xff]
    %v373 = vld [vmem:[#allocation3 + $0x128] sm:$0xff]
    %v374 = vld [vmem:[#allocation3 + $0x130] sm:$0xff]
    %v375 = vld [vmem:[#allocation3 + $0x138] sm:$0xff]
    %v376 = vld [vmem:[#allocation3 + $0x140] sm:$0xff]
    %v377 = vld [vmem:[#allocation3 + $0x148] sm:$0xff]
    %v378 = vld [vmem:[#allocation3 + $0x150] sm:$0xff]
    %v379 = vld [vmem:[#allocation3 + $0x158] sm:$0xff]
    %v380 = vld [vmem:[#allocation3 + $0x160] sm:$0xff]
    %v381 = vld [vmem:[#allocation3 + $0x168] sm:$0xff]
    %v382 = vld [vmem:[#allocation3 + $0x170] sm:$0xff]
    %v383 = vld [vmem:[#allocation3 + $0x178] sm:$0xff]
    %v384 = vld [vmem:[#allocation3 + $0x180] sm:$0xff]
    %v385 = vld [vmem:[#allocation3 + $0x188] sm:$0xff]
    %v386 = vld [vmem:[#allocation3 + $0x190] sm:$0xff]
    %v387 = vld [vmem:[#allocation3 + $0x198] sm:$0xff]
    %v388 = vld [vmem:[#allocation3 + $0x1a0] sm:$0xff]
    %v389 = vld [vmem:[#allocation3 + $0x1a8] sm:$0xff]
    %v390 = vld [vmem:[#allocation3 + $0x1b0] sm:$0xff]
    %v391 = vld [vmem:[#allocation3 + $0x1b8] sm:$0xff]
    %v392 = vld [vmem:[#allocation3 + $0x1c0] sm:$0xff]
    %v393 = vld [vmem:[#allocation3 + $0x1c8] sm:$0xff]
    %v394 = vld [vmem:[#allocation3 + $0x1d0] sm:$0xff]
    %v395 = vld [vmem:[#allocation3 + $0x1d8] sm:$0xff]
    %v396 = vld [vmem:[#allocation3 + $0x1e0] sm:$0xff]
    %v397 = vld [vmem:[#allocation3 + $0x1e8] sm:$0xff]
    %v398 = vld [vmem:[#allocation3 + $0x1f0] sm:$0xff]
    %v399 = vld [vmem:[#allocation3 + $0x1f8] sm:$0xff]
    %v400 = vld [vmem:[#allocation3 + $0x200] sm:$0xff]
    %v401 = vld [vmem:[#allocation3 + $0x208] sm:$0xff]
    %v402 = vld [vmem:[#allocation3 + $0x210] sm:$0xff]
    %v403 = vld [vmem:[#allocation3 + $0x218] sm:$0xff]
    %v404 = vld [vmem:[#allocation3 + $0x220] sm:$0xff]
    %v405 = vld [vmem:[#allocation3 + $0x228] sm:$0xff]
    %v406 = vld [vmem:[#allocation3 + $0x230] sm:$0xff]
    %v407 = vld [vmem:[#allocation3 + $0x238] sm:$0xff]
    %v408 = vld [vmem:[#allocation3 + $0x240] sm:$0xff]
    %v409 = vld [vmem:[#allocation3 + $0x248] sm:$0xff]
    %v410 = vld [vmem:[#allocation3 + $0x250] sm:$0xff]
    %v411 = vld [vmem:[#allocation3 + $0x258] sm:$0xff]
    %v412 = vld [vmem:[#allocation3 + $0x260] sm:$0xff]
    %v413 = vld [vmem:[#allocation3 + $0x268] sm:$0xff]
    %v414 = vld [vmem:[#allocation3 + $0x270] sm:$0xff]
    %v415 = vld [vmem:[#allocation3 + $0x278] sm:$0xff]
    %v416 = vld [vmem:[#allocation3 + $0x280] sm:$0xff]
    %v417 = vld [vmem:[#allocation3 + $0x288] sm:$0xff]
    %v418 = vld [vmem:[#allocation3 + $0x290] sm:$0xff]
    %v419 = vld [vmem:[#allocation3 + $0x298] sm:$0xff]
    %v420 = vld [vmem:[#allocation3 + $0x2a0] sm:$0xff]
    %v421 = vld [vmem:[#allocation3 + $0x2a8] sm:$0xff]
    %v422 = vld [vmem:[#allocation3 + $0x2b0] sm:$0xff]
    %v423 = vld [vmem:[#allocation3 + $0x2b8] sm:$0xff]
    %v424 = vld [vmem:[#allocation3 + $0x2c0] sm:$0xff]
    %v425 = vld [vmem:[#allocation3 + $0x2c8] sm:$0xff]
    %v426 = vld [vmem:[#allocation3 + $0x2d0] sm:$0xff]
    %v427 = vld [vmem:[#allocation3 + $0x2d8] sm:$0xff]
    %v428 = vld [vmem:[#allocation3 + $0x2e0] sm:$0xff]
    %v429 = vld [vmem:[#allocation3 + $0x2e8] sm:$0xff]
    %v430 = vld [vmem:[#allocation3 + $0x2f0] sm:$0xff]
    %v431 = vld [vmem:[#allocation3 + $0x2f8] sm:$0xff]
    %v432 = vld [vmem:[#allocation3 + $0x300] sm:$0xff]
    %v433 = vld [vmem:[#allocation3 + $0x308] sm:$0xff]
    %v434 = vld [vmem:[#allocation3 + $0x310] sm:$0xff]
    %v435 = vld [vmem:[#allocation3 + $0x318] sm:$0xff]
    %v436 = vld [vmem:[#allocation3 + $0x320] sm:$0xff]
    %v437 = vld [vmem:[#allocation3 + $0x328] sm:$0xff]
    %v438 = vld [vmem:[#allocation3 + $0x330] sm:$0xff]
    %v439 = vld [vmem:[#allocation3 + $0x338] sm:$0xff]
    %v440 = vld [vmem:[#allocation3 + $0x340] sm:$0xff]
    %v441 = vld [vmem:[#allocation3 + $0x348] sm:$0xff]
    %v442 = vld [vmem:[#allocation3 + $0x350] sm:$0xff]
    %v443 = vld [vmem:[#allocation3 + $0x358] sm:$0xff]
    %v444 = vld [vmem:[#allocation3 + $0x360] sm:$0xff]
    %v445 = vld [vmem:[#allocation3 + $0x368] sm:$0xff]
    %v446 = vld [vmem:[#allocation3 + $0x370] sm:$0xff]
    %v447 = vld [vmem:[#allocation3 + $0x378] sm:$0xff]
    %v448 = vld [vmem:[#allocation3 + $0x380] sm:$0xff]
    %v449 = vld [vmem:[#allocation3 + $0x388] sm:$0xff]
    %v450 = vld [vmem:[#allocation3 + $0x390] sm:$0xff]
    %v451 = vld [vmem:[#allocation3 + $0x398] sm:$0xff]
    %v452 = vld [vmem:[#allocation3 + $0x3a0] sm:$0xff]
    %v453 = vld [vmem:[#allocation3 + $0x3a8] sm:$0xff]
    %v454 = vld [vmem:[#allocation3 + $0x3b0] sm:$0xff]
    %v455 = vld [vmem:[#allocation3 + $0x3b8] sm:$0xff]
    %v456 = vld [vmem:[#allocation3 + $0x3c0] sm:$0xff]
    %v457 = vld [vmem:[#allocation3 + $0x3c8] sm:$0xff]
    %v458 = vld [vmem:[#allocation3 + $0x3d0] sm:$0xff]
    %v459 = vld [vmem:[#allocation3 + $0x3d8] sm:$0xff]
    %v460 = vld [vmem:[#allocation3 + $0x3e0] sm:$0xff]
    %v461 = vld [vmem:[#allocation3 + $0x3e8] sm:$0xff]
    %v462 = vld [vmem:[#allocation3 + $0x3f0] sm:$0xff]
    %v463 = vld [vmem:[#allocation3 + $0x3f8] sm:$0xff]
    %v464 = vld [vmem:[#allocation3 + $0x400] sm:$0xff]
    %v465 = vld [vmem:[#allocation3 + $0x408] sm:$0xff]
    %v466 = vld [vmem:[#allocation3 + $0x410] sm:$0xff]
    %v467 = vld [vmem:[#allocation3 + $0x418] sm:$0xff]
    %v468 = vld [vmem:[#allocation3 + $0x420] sm:$0xff]
    %v469 = vld [vmem:[#allocation3 + $0x428] sm:$0xff]
    %v470 = vld [vmem:[#allocation3 + $0x430] sm:$0xff]
    %v471 = vld [vmem:[#allocation3 + $0x438] sm:$0xff]
    %v472 = vld [vmem:[#allocation3 + $0x440] sm:$0xff]
    %v473 = vld [vmem:[#allocation3 + $0x448] sm:$0xff]
    %v474 = vld [vmem:[#allocation3 + $0x450] sm:$0xff]
    %v475 = vld [vmem:[#allocation3 + $0x458] sm:$0xff]
    %v476 = vld [vmem:[#allocation3 + $0x460] sm:$0xff]
    %v477 = vld [vmem:[#allocation3 + $0x468] sm:$0xff]
    %v478 = vld [vmem:[#allocation3 + $0x470] sm:$0xff]
    %v479 = vld [vmem:[#allocation3 + $0x478] sm:$0xff]
    %v480 = vld [vmem:[#allocation3 + $0x480] sm:$0xff]
    %v481 = vld [vmem:[#allocation3 + $0x488] sm:$0xff]
    %v482 = vld [vmem:[#allocation3 + $0x490] sm:$0xff]
    %v483 = vld [vmem:[#allocation3 + $0x498] sm:$0xff]
    %v484 = vld [vmem:[#allocation3 + $0x4a0] sm:$0xff]
    %v485 = vld [vmem:[#allocation3 + $0x4a8] sm:$0xff]
    %v486 = vld [vmem:[#allocation3 + $0x4b0] sm:$0xff]
    %v487 = vld [vmem:[#allocation3 + $0x4b8] sm:$0xff]
    %v488 = vld [vmem:[#allocation3 + $0x4c0] sm:$0xff]
    %v489 = vld [vmem:[#allocation3 + $0x4c8] sm:$0xff]
    %v490 = vld [vmem:[#allocation3 + $0x4d0] sm:$0xff]
    %v491 = vld [vmem:[#allocation3 + $0x4d8] sm:$0xff]
    %v492 = vld [vmem:[#allocation3 + $0x4e0] sm:$0xff]
    %v493 = vld [vmem:[#allocation3 + $0x4e8] sm:$0xff]
    %v494 = vld [vmem:[#allocation3 + $0x4f0] sm:$0xff]
    %v495 = vld [vmem:[#allocation3 + $0x4f8] sm:$0xff]
    %v496 = vld [vmem:[#allocation3 + $0x500] sm:$0xff]
    %v497 = vld [vmem:[#allocation3 + $0x508] sm:$0xff]
    %v498 = vld [vmem:[#allocation3 + $0x510] sm:$0xff]
    %v499 = vld [vmem:[#allocation3 + $0x518] sm:$0xff]
    %v500 = vld [vmem:[#allocation3 + $0x520] sm:$0xff]
    %v501 = vld [vmem:[#allocation3 + $0x528] sm:$0xff]
    %v502 = vld [vmem:[#allocation3 + $0x530] sm:$0xff]
    %v503 = vld [vmem:[#allocation3 + $0x538] sm:$0xff]
    %v504 = vld [vmem:[#allocation3 + $0x540] sm:$0xff]
    %v505 = vld [vmem:[#allocation3 + $0x548] sm:$0xff]
    %v506 = vld [vmem:[#allocation3 + $0x550] sm:$0xff]
    %v507 = vld [vmem:[#allocation3 + $0x558] sm:$0xff]
    %v508 = vld [vmem:[#allocation3 + $0x560] sm:$0xff]
    %v509 = vld [vmem:[#allocation3 + $0x568] sm:$0xff]
    %v510 = vld [vmem:[#allocation3 + $0x570] sm:$0xff]
    %v511 = vld [vmem:[#allocation3 + $0x578] sm:$0xff]
    %v512 = vld [vmem:[#allocation3 + $0x580] sm:$0xff]
    %v513 = vld [vmem:[#allocation3 + $0x588] sm:$0xff]
    %v514 = vld [vmem:[#allocation3 + $0x590] sm:$0xff]
    %v515 = vld [vmem:[#allocation3 + $0x598] sm:$0xff]
    %v516 = vld [vmem:[#allocation3 + $0x5a0] sm:$0xff]
    %v517 = vld [vmem:[#allocation3 + $0x5a8] sm:$0xff]
    %v518 = vld [vmem:[#allocation3 + $0x5b0] sm:$0xff]
    %v519 = vld [vmem:[#allocation3 + $0x5b8] sm:$0xff]
    %v520 = vld [vmem:[#allocation3 + $0x5c0] sm:$0xff]
    %v521 = vld [vmem:[#allocation3 + $0x5c8] sm:$0xff]
    %v522 = vld [vmem:[#allocation3 + $0x5d0] sm:$0xff]
    %v523 = vld [vmem:[#allocation3 + $0x5d8] sm:$0xff]
    %v524 = vld [vmem:[#allocation3 + $0x5e0] sm:$0xff]
    %v525 = vld [vmem:[#allocation3 + $0x5e8] sm:$0xff]
    %v526 = vld [vmem:[#allocation3 + $0x5f0] sm:$0xff]
    %v527 = vld [vmem:[#allocation3 + $0x5f8] sm:$0xff]
    %v528 = vld [vmem:[#allocation3 + $0x600] sm:$0xff]
    %v529 = vld [vmem:[#allocation3 + $0x608] sm:$0xff]
    %v530 = vld [vmem:[#allocation3 + $0x610] sm:$0xff]
    %v531 = vld [vmem:[#allocation3 + $0x618] sm:$0xff]
    %v532 = vld [vmem:[#allocation3 + $0x620] sm:$0xff]
    %v533 = vld [vmem:[#allocation3 + $0x628] sm:$0xff]
    %v534 = vld [vmem:[#allocation3 + $0x630] sm:$0xff]
    %v535 = vld [vmem:[#allocation3 + $0x638] sm:$0xff]
    %v536 = vld [vmem:[#allocation3 + $0x640] sm:$0xff]
    %v537 = vld [vmem:[#allocation3 + $0x648] sm:$0xff]
    %v538 = vld [vmem:[#allocation3 + $0x650] sm:$0xff]
    %v539 = vld [vmem:[#allocation3 + $0x658] sm:$0xff]
    %v540 = vld [vmem:[#allocation3 + $0x660] sm:$0xff]
    %v541 = vld [vmem:[#allocation3 + $0x668] sm:$0xff]
    %v542 = vld [vmem:[#allocation3 + $0x670] sm:$0xff]
    %v543 = vld [vmem:[#allocation3 + $0x678] sm:$0xff]
    %v544 = vld [vmem:[#allocation3 + $0x680] sm:$0xff]
    %v545 = vld [vmem:[#allocation3 + $0x688] sm:$0xff]
    %v546 = vld [vmem:[#allocation3 + $0x690] sm:$0xff]
    %v547 = vld [vmem:[#allocation3 + $0x698] sm:$0xff]
    %v548 = vld [vmem:[#allocation3 + $0x6a0] sm:$0xff]
    %v549 = vld [vmem:[#allocation3 + $0x6a8] sm:$0xff]
    %v550 = vld [vmem:[#allocation3 + $0x6b0] sm:$0xff]
    %v551 = vld [vmem:[#allocation3 + $0x6b8] sm:$0xff]
    %v552 = vld [vmem:[#allocation3 + $0x6c0] sm:$0xff]
    %v553 = vld [vmem:[#allocation3 + $0x6c8] sm:$0xff]
    %v554 = vld [vmem:[#allocation3 + $0x6d0] sm:$0xff]
    %v555 = vld [vmem:[#allocation3 + $0x6d8] sm:$0xff]
    %v556 = vld [vmem:[#allocation3 + $0x6e0] sm:$0xff]
    %v557 = vld [vmem:[#allocation3 + $0x6e8] sm:$0xff]
    %v558 = vld [vmem:[#allocation3 + $0x6f0] sm:$0xff]
    %v559 = vld [vmem:[#allocation3 + $0x6f8] sm:$0xff]
    %v560 = vld [vmem:[#allocation3 + $0x700] sm:$0xff]
    %v561 = vld [vmem:[#allocation3 + $0x708] sm:$0xff]
    %v562 = vld [vmem:[#allocation3 + $0x710] sm:$0xff]
    %v563 = vld [vmem:[#allocation3 + $0x718] sm:$0xff]
    %v564 = vld [vmem:[#allocation3 + $0x720] sm:$0xff]
    %v565 = vld [vmem:[#allocation3 + $0x728] sm:$0xff]
    %v566 = vld [vmem:[#allocation3 + $0x730] sm:$0xff]
    %v567 = vld [vmem:[#allocation3 + $0x738] sm:$0xff]
    %v568 = vld [vmem:[#allocation3 + $0x740] sm:$0xff]
    %v569 = vld [vmem:[#allocation3 + $0x748] sm:$0xff]
    %v570 = vld [vmem:[#allocation3 + $0x750] sm:$0xff]
    %v571 = vld [vmem:[#allocation3 + $0x758] sm:$0xff]
    %v572 = vld [vmem:[#allocation3 + $0x760] sm:$0xff]
    %v573 = vld [vmem:[#allocation3 + $0x768] sm:$0xff]
    %v574 = vld [vmem:[#allocation3 + $0x770] sm:$0xff]
    %v575 = vld [vmem:[#allocation3 + $0x778] sm:$0xff]
    %v576 = vld [vmem:[#allocation3 + $0x780] sm:$0xff]
    %v577 = vld [vmem:[#allocation3 + $0x788] sm:$0xff]
    %v578 = vld [vmem:[#allocation3 + $0x790] sm:$0xff]
    %v579 = vld [vmem:[#allocation3 + $0x798] sm:$0xff]
    %v580 = vld [vmem:[#allocation3 + $0x7a0] sm:$0xff]
    %v581 = vld [vmem:[#allocation3 + $0x7a8] sm:$0xff]
    %v582 = vld [vmem:[#allocation3 + $0x7b0] sm:$0xff]
    %v583 = vld [vmem:[#allocation3 + $0x7b8] sm:$0xff]
    %v584 = vld [vmem:[#allocation3 + $0x7c0] sm:$0xff]
    %v585 = vld [vmem:[#allocation3 + $0x7c8] sm:$0xff]
    %v586 = vld [vmem:[#allocation3 + $0x7d0] sm:$0xff]
    %v587 = vld [vmem:[#allocation3 + $0x7d8] sm:$0xff]
    %v588 = vld [vmem:[#allocation3 + $0x7e0] sm:$0xff]
    %v589 = vld [vmem:[#allocation3 + $0x7e8] sm:$0xff]
    %v590 = vld [vmem:[#allocation3 + $0x7f0] sm:$0xff]
    %v591 = vld [vmem:[#allocation3 + $0x7f8] sm:$0xff]
    %v592 = vld [vmem:[%s5] sm:$0xf]
    %v594 = vlaneseq
    %v595 = vshrl.u32 %v594, 7
    %v596 = vsub.s32 0, %v595
    %v597 = vrot.slane %v592, %v596
    %v598 = vlaneseq
    %v599 = vshrl.u32 %v598, 7
    %v600 = vsub.s32 1, %v599
    %v601 = vrot.slane %v592, %v600
    %v602 = vlaneseq
    %v603 = vshrl.u32 %v602, 7
    %v604 = vsub.s32 2, %v603
    %v605 = vrot.slane %v592, %v604
    %v606 = vlaneseq
    %v607 = vshrl.u32 %v606, 7
    %v608 = vsub.s32 3, %v607
    %v609 = vrot.slane %v592, %v608
    %614 = vmatprep.subr.mxu0 %v337
    %615 = vmatpush1.msra.mxu0 %v336
    %616 = vmatprep.subr.mxu0 %v341
    %617 = vmatpush1.msra.mxu0 %v340
    %618 = vmatprep.subr.mxu0 %v345
    %619 = vmatpush1.msra.mxu0 %v344
    %620 = vmatprep.subr.mxu0 %v349
    %621 = vmatpush1.msra.mxu0 %v348
    %622 = vmatprep.subr.mxu0 %v353
    %623 = vmatpush1.msra.mxu0 %v352
    %624 = vmatprep.subr.mxu0 %v357
    %625 = vmatpush1.msra.mxu0 %v356
    %626 = vmatprep.subr.mxu0 %v361
    %627 = vmatpush1.msra.mxu0 %v360
    %628 = vmatprep.subr.mxu0 %v365
    %629 = vmatpush1.msra.mxu0 %v364
    %630 = vmatprep.subr.mxu0 %v369
    %631 = vmatpush1.msra.mxu0 %v368
    %632 = vmatprep.subr.mxu0 %v373
    %633 = vmatpush1.msra.mxu0 %v372
    %634 = vmatprep.subr.mxu0 %v377
    %635 = vmatpush1.msra.mxu0 %v376
    %636 = vmatprep.subr.mxu0 %v381
    %637 = vmatpush1.msra.mxu0 %v380
    %638 = vmatprep.subr.mxu0 %v385
    %639 = vmatpush1.msra.mxu0 %v384
    %640 = vmatprep.subr.mxu0 %v389
    %641 = vmatpush1.msra.mxu0 %v388
    %642 = vmatprep.subr.mxu0 %v393
    %643 = vmatpush1.msra.mxu0 %v392
    %644 = vmatprep.subr.mxu0 %v397
    %645 = vmatpush1.msra.mxu0 %v396
    %646 = vmatprep.subr.mxu0 %v401
    %647 = vmatpush1.msra.mxu0 %v400
    %648 = vmatprep.subr.mxu0 %v405
    %649 = vmatpush1.msra.mxu0 %v404
    %650 = vmatprep.subr.mxu0 %v409
    %651 = vmatpush1.msra.mxu0 %v408
    %652 = vmatprep.subr.mxu0 %v413
    %653 = vmatpush1.msra.mxu0 %v412
    %654 = vmatprep.subr.mxu0 %v417
    %655 = vmatpush1.msra.mxu0 %v416
    %656 = vmatprep.subr.mxu0 %v421
    %657 = vmatpush1.msra.mxu0 %v420
    %658 = vmatprep.subr.mxu0 %v425
    %659 = vmatpush1.msra.mxu0 %v424
    %660 = vmatprep.subr.mxu0 %v429
    %661 = vmatpush1.msra.mxu0 %v428
    %662 = vmatprep.subr.mxu0 %v433
    %663 = vmatpush1.msra.mxu0 %v432
    %664 = vmatprep.subr.mxu0 %v437
    %665 = vmatpush1.msra.mxu0 %v436
    %666 = vmatprep.subr.mxu0 %v441
    %667 = vmatpush1.msra.mxu0 %v440
    %668 = vmatprep.subr.mxu0 %v445
    %669 = vmatpush1.msra.mxu0 %v444
    %670 = vmatprep.subr.mxu0 %v449
    %671 = vmatpush1.msra.mxu0 %v448
    %672 = vmatprep.subr.mxu0 %v453
    %673 = vmatpush1.msra.mxu0 %v452
    %674 = vmatprep.subr.mxu0 %v457
    %675 = vmatpush1.msra.mxu0 %v456
    %676 = vmatprep.subr.mxu0 %v461
    %677 = vmatpush1.msra.mxu0 %v460
    %678 = vmatprep.mubr.f32.mxu0 %v321
    %679 = vmatmul.mubr.f32.gmra.mrb[0].mxu0 %v320
    %v680 = vpop.f32.mrb[0].mxu0
    %v681 = vadd.f32 %v597, %v680
    %v682 = vpop.f32.mrb[0].mxu0
    %v683 = vadd.f32 %v601, %v682
    %684 = vmatprep.mubr.f32.mxu0 %v325
    %685 = vmatmul.mubr.f32.gmra.mrb[0].mxu0 %v324
    %v686 = vpop.f32.mrb[0].mxu0
    %v687 = vadd.f32 %v597, %v686
    %v688 = vpop.f32.mrb[0].mxu0
    %v689 = vadd.f32 %v601, %v688
    %690 = vmatprep.mubr.f32.mxu0 %v329
    %691 = vmatmul.mubr.f32.gmra.mrb[0].mxu0 %v328
    %v692 = vpop.f32.mrb[0].mxu0
    %v693 = vadd.f32 %v597, %v692
    %v694 = vpop.f32.mrb[0].mxu0
    %v695 = vadd.f32 %v601, %v694
    %696 = vmatprep.mubr.f32.mxu0 %v333
    %697 = vmatmul.mubr.f32.gmra.mrb[0].mxu0 %v332
    %v698 = vpop.f32.mrb[0].mxu0
    %v699 = vadd.f32 %v597, %v698
    %v700 = vpop.f32.mrb[0].mxu0
    %v701 = vadd.f32 %v601, %v700
    %702 = vdwg.mxu0
    %703 = vmatprep.subr.mxu0 %v465
    %704 = vmatpush1.msra.mxu0 %v464
    %705 = vmatprep.subr.mxu0 %v469
    %706 = vmatpush1.msra.mxu0 %v468
    %707 = vmatprep.subr.mxu0 %v473
    %708 = vmatpush1.msra.mxu0 %v472
    %709 = vmatprep.subr.mxu0 %v477
    %710 = vmatpush1.msra.mxu0 %v476
    %711 = vmatprep.subr.mxu0 %v481
    %712 = vmatpush1.msra.mxu0 %v480
    %713 = vmatprep.subr.mxu0 %v485
    %714 = vmatpush1.msra.mxu0 %v484
    %715 = vmatprep.subr.mxu0 %v489
    %716 = vmatpush1.msra.mxu0 %v488
    %717 = vmatprep.subr.mxu0 %v493
    %718 = vmatpush1.msra.mxu0 %v492
    %719 = vmatprep.subr.mxu0 %v497
    %720 = vmatpush1.msra.mxu0 %v496
    %721 = vmatprep.subr.mxu0 %v501
    %722 = vmatpush1.msra.mxu0 %v500
    %723 = vmatprep.subr.mxu0 %v505
    %724 = vmatpush1.msra.mxu0 %v504
    %725 = vmatprep.subr.mxu0 %v509
    %726 = vmatpush1.msra.mxu0 %v508
    %727 = vmatprep.subr.mxu0 %v513
    %728 = vmatpush1.msra.mxu0 %v512
    %729 = vmatprep.subr.mxu0 %v517
    %730 = vmatpush1.msra.mxu0 %v516
    %731 = vmatprep.subr.mxu0 %v521
    %732 = vmatpush1.msra.mxu0 %v520
    %733 = vmatprep.subr.mxu0 %v525
    %734 = vmatpush1.msra.mxu0 %v524
    %735 = vmatprep.subr.mxu0 %v529
    %736 = vmatpush1.msra.mxu0 %v528
    %737 = vmatprep.subr.mxu0 %v533
    %738 = vmatpush1.msra.mxu0 %v532
    %739 = vmatprep.subr.mxu0 %v537
    %740 = vmatpush1.msra.mxu0 %v536
    %741 = vmatprep.subr.mxu0 %v541
    %742 = vmatpush1.msra.mxu0 %v540
    %743 = vmatprep.subr.mxu0 %v545
    %744 = vmatpush1.msra.mxu0 %v544
    %745 = vmatprep.subr.mxu0 %v549
    %746 = vmatpush1.msra.mxu0 %v548
    %747 = vmatprep.subr.mxu0 %v553
    %748 = vmatpush1.msra.mxu0 %v552
    %749 = vmatprep.subr.mxu0 %v557
    %750 = vmatpush1.msra.mxu0 %v556
    %751 = vmatprep.subr.mxu0 %v561
    %752 = vmatpush1.msra.mxu0 %v560
    %753 = vmatprep.subr.mxu0 %v565
    %754 = vmatpush1.msra.mxu0 %v564
    %755 = vmatprep.subr.mxu0 %v569
    %756 = vmatpush1.msra.mxu0 %v568
    %757 = vmatprep.subr.mxu0 %v573
    %758 = vmatpush1.msra.mxu0 %v572
    %759 = vmatprep.subr.mxu0 %v577
    %760 = vmatpush1.msra.mxu0 %v576
    %761 = vmatprep.subr.mxu0 %v581
    %762 = vmatpush1.msra.mxu0 %v580
    %763 = vmatprep.subr.mxu0 %v585
    %764 = vmatpush1.msra.mxu0 %v584
    %765 = vmatprep.subr.mxu0 %v589
    %766 = vmatpush1.msra.mxu0 %v588
    %767 = vmatprep.mubr.f32.mxu0 %v323
    %768 = vmatmul.mubr.f32.gmra.mrb[0].mxu0 %v322
    %v769 = vpop.f32.mrb[0].mxu0
    %v770 = vadd.f32 %v681, %v769
    %v771 = vpop.f32.mrb[0].mxu0
    %v772 = vadd.f32 %v683, %v771
    %773 = vmatprep.mubr.f32.mxu0 %v327
    %774 = vmatmul.mubr.f32.gmra.mrb[0].mxu0 %v326
    %v775 = vpop.f32.mrb[0].mxu0
    %v776 = vadd.f32 %v687, %v775
    %v777 = vpop.f32.mrb[0].mxu0
    %v778 = vadd.f32 %v689, %v777
    %779 = vmatprep.mubr.f32.mxu0 %v331
    %780 = vmatmul.mubr.f32.gmra.mrb[0].mxu0 %v330
    %v781 = vpop.f32.mrb[0].mxu0
    %v782 = vadd.f32 %v693, %v781
    %v783 = vpop.f32.mrb[0].mxu0
    %v784 = vadd.f32 %v695, %v783
    %785 = vmatprep.mubr.f32.mxu0 %v335
    %786 = vmatmul.mubr.f32.gmra.mrb[0].mxu0 %v334
    %v787 = vpop.f32.mrb[0].mxu0
    %v788 = vadd.f32 %v699, %v787
    %v789 = vpop.f32.mrb[0].mxu0
    %v790 = vadd.f32 %v701, %v789
    %791 = vdwg.mxu0
    %792 = vmatprep.subr.mxu0 %v339
    %793 = vmatpush1.msra.mxu0 %v338
    %794 = vmatprep.subr.mxu0 %v343
    %795 = vmatpush1.msra.mxu0 %v342
    %796 = vmatprep.subr.mxu0 %v347
    %797 = vmatpush1.msra.mxu0 %v346
    %798 = vmatprep.subr.mxu0 %v351
    %799 = vmatpush1.msra.mxu0 %v350
    %800 = vmatprep.subr.mxu0 %v355
    %801 = vmatpush1.msra.mxu0 %v354
    %802 = vmatprep.subr.mxu0 %v359
    %803 = vmatpush1.msra.mxu0 %v358
    %804 = vmatprep.subr.mxu0 %v363
    %805 = vmatpush1.msra.mxu0 %v362
    %806 = vmatprep.subr.mxu0 %v367
    %807 = vmatpush1.msra.mxu0 %v366
    %808 = vmatprep.subr.mxu0 %v371
    %809 = vmatpush1.msra.mxu0 %v370
    %810 = vmatprep.subr.mxu0 %v375
    %811 = vmatpush1.msra.mxu0 %v374
    %812 = vmatprep.subr.mxu0 %v379
    %813 = vmatpush1.msra.mxu0 %v378
    %814 = vmatprep.subr.mxu0 %v383
    %815 = vmatpush1.msra.mxu0 %v382
    %816 = vmatprep.subr.mxu0 %v387
    %817 = vmatpush1.msra.mxu0 %v386
    %818 = vmatprep.subr.mxu0 %v391
    %819 = vmatpush1.msra.mxu0 %v390
    %820 = vmatprep.subr.mxu0 %v395
    %821 = vmatpush1.msra.mxu0 %v394
    %822 = vmatprep.subr.mxu0 %v399
    %823 = vmatpush1.msra.mxu0 %v398
    %824 = vmatprep.subr.mxu0 %v403
    %825 = vmatpush1.msra.mxu0 %v402
    %826 = vmatprep.subr.mxu0 %v407
    %827 = vmatpush1.msra.mxu0 %v406
    %828 = vmatprep.subr.mxu0 %v411
    %829 = vmatpush1.msra.mxu0 %v410
    %830 = vmatprep.subr.mxu0 %v415
    %831 = vmatpush1.msra.mxu0 %v414
    %832 = vmatprep.subr.mxu0 %v419
    %833 = vmatpush1.msra.mxu0 %v418
    %834 = vmatprep.subr.mxu0 %v423
    %835 = vmatpush1.msra.mxu0 %v422
    %836 = vmatprep.subr.mxu0 %v427
    %837 = vmatpush1.msra.mxu0 %v426
    %838 = vmatprep.subr.mxu0 %v431
    %839 = vmatpush1.msra.mxu0 %v430
    %840 = vmatprep.subr.mxu0 %v435
    %841 = vmatpush1.msra.mxu0 %v434
    %842 = vmatprep.subr.mxu0 %v439
    %843 = vmatpush1.msra.mxu0 %v438
    %844 = vmatprep.subr.mxu0 %v443
    %845 = vmatpush1.msra.mxu0 %v442
    %846 = vmatprep.subr.mxu0 %v447
    %847 = vmatpush1.msra.mxu0 %v446
    %848 = vmatprep.subr.mxu0 %v451
    %849 = vmatpush1.msra.mxu0 %v450
    %850 = vmatprep.subr.mxu0 %v455
    %851 = vmatpush1.msra.mxu0 %v454
    %852 = vmatprep.subr.mxu0 %v459
    %853 = vmatpush1.msra.mxu0 %v458
    %854 = vmatprep.subr.mxu0 %v463
    %855 = vmatpush1.msra.mxu0 %v462
    %856 = vmatprep.mubr.f32.mxu0 %v321
    %857 = vmatmul.mubr.f32.gmra.mrb[0].mxu0 %v320
    %v858 = vpop.f32.mrb[0].mxu0
    %v859 = vadd.f32 %v605, %v858
    %v860 = vpop.f32.mrb[0].mxu0
    %v861 = vadd.f32 %v609, %v860
    %862 = vmatprep.mubr.f32.mxu0 %v325
    %863 = vmatmul.mubr.f32.gmra.mrb[0].mxu0 %v324
    %v864 = vpop.f32.mrb[0].mxu0
    %v865 = vadd.f32 %v605, %v864
    %v866 = vpop.f32.mrb[0].mxu0
    %v867 = vadd.f32 %v609, %v866
    %868 = vmatprep.mubr.f32.mxu0 %v329
    %869 = vmatmul.mubr.f32.gmra.mrb[0].mxu0 %v328
    %v870 = vpop.f32.mrb[0].mxu0
    %v871 = vadd.f32 %v605, %v870
    %v872 = vpop.f32.mrb[0].mxu0
    %v873 = vadd.f32 %v609, %v872
    %874 = vmatprep.mubr.f32.mxu0 %v333
    %875 = vmatmul.mubr.f32.gmra.mrb[0].mxu0 %v332
    %v876 = vpop.f32.mrb[0].mxu0
    %v877 = vadd.f32 %v605, %v876
    %v878 = vpop.f32.mrb[0].mxu0
    %v879 = vadd.f32 %v609, %v878
    %880 = vdwg.mxu0
    %881 = vmatprep.subr.mxu0 %v467
    %882 = vmatpush1.msra.mxu0 %v466
    %883 = vmatprep.subr.mxu0 %v471
    %884 = vmatpush1.msra.mxu0 %v470
    %885 = vmatprep.subr.mxu0 %v475
    %886 = vmatpush1.msra.mxu0 %v474
    %887 = vmatprep.subr.mxu0 %v479
    %888 = vmatpush1.msra.mxu0 %v478
    %889 = vmatprep.subr.mxu0 %v483
    %890 = vmatpush1.msra.mxu0 %v482
    %891 = vmatprep.subr.mxu0 %v487
    %892 = vmatpush1.msra.mxu0 %v486
    %893 = vmatprep.subr.mxu0 %v491
    %894 = vmatpush1.msra.mxu0 %v490
    %895 = vmatprep.subr.mxu0 %v495
    %896 = vmatpush1.msra.mxu0 %v494
    %897 = vmatprep.subr.mxu0 %v499
    %898 = vmatpush1.msra.mxu0 %v498
    %899 = vmatprep.subr.mxu0 %v503
    %900 = vmatpush1.msra.mxu0 %v502
    %901 = vmatprep.subr.mxu0 %v507
    %902 = vmatpush1.msra.mxu0 %v506
    %903 = vmatprep.subr.mxu0 %v511
    %904 = vmatpush1.msra.mxu0 %v510
    %905 = vmatprep.subr.mxu0 %v515
    %906 = vmatpush1.msra.mxu0 %v514
    %907 = vmatprep.subr.mxu0 %v519
    %908 = vmatpush1.msra.mxu0 %v518
    %909 = vmatprep.subr.mxu0 %v523
    %910 = vmatpush1.msra.mxu0 %v522
    %911 = vmatprep.subr.mxu0 %v527
    %912 = vmatpush1.msra.mxu0 %v526
    %913 = vmatprep.subr.mxu0 %v531
    %914 = vmatpush1.msra.mxu0 %v530
    %915 = vmatprep.subr.mxu0 %v535
    %916 = vmatpush1.msra.mxu0 %v534
    %917 = vmatprep.subr.mxu0 %v539
    %918 = vmatpush1.msra.mxu0 %v538
    %919 = vmatprep.subr.mxu0 %v543
    %920 = vmatpush1.msra.mxu0 %v542
    %921 = vmatprep.subr.mxu0 %v547
    %922 = vmatpush1.msra.mxu0 %v546
    %923 = vmatprep.subr.mxu0 %v551
    %924 = vmatpush1.msra.mxu0 %v550
    %925 = vmatprep.subr.mxu0 %v555
    %926 = vmatpush1.msra.mxu0 %v554
    %927 = vmatprep.subr.mxu0 %v559
    %928 = vmatpush1.msra.mxu0 %v558
    %929 = vmatprep.subr.mxu0 %v563
    %930 = vmatpush1.msra.mxu0 %v562
    %931 = vmatprep.subr.mxu0 %v567
    %932 = vmatpush1.msra.mxu0 %v566
    %933 = vmatprep.subr.mxu0 %v571
    %934 = vmatpush1.msra.mxu0 %v570
    %935 = vmatprep.subr.mxu0 %v575
    %936 = vmatpush1.msra.mxu0 %v574
    %937 = vmatprep.subr.mxu0 %v579
    %938 = vmatpush1.msra.mxu0 %v578
    %939 = vmatprep.subr.mxu0 %v583
    %940 = vmatpush1.msra.mxu0 %v582
    %941 = vmatprep.subr.mxu0 %v587
    %942 = vmatpush1.msra.mxu0 %v586
    %943 = vmatprep.subr.mxu0 %v591
    %944 = vmatpush1.msra.mxu0 %v590
    %945 = vmatprep.mubr.f32.mxu0 %v323
    %946 = vmatmul.mubr.f32.gmra.mrb[0].mxu0 %v322
    %v947 = vpop.f32.mrb[0].mxu0
    %v948 = vadd.f32 %v859, %v947
    %v949 = vpop.f32.mrb[0].mxu0
    %v950 = vadd.f32 %v861, %v949
    %951 = vmatprep.mubr.f32.mxu0 %v327
    %952 = vmatmul.mubr.f32.gmra.mrb[0].mxu0 %v326
    %v953 = vpop.f32.mrb[0].mxu0
    %v954 = vadd.f32 %v865, %v953
    %v955 = vpop.f32.mrb[0].mxu0
    %v956 = vadd.f32 %v867, %v955
    %957 = vmatprep.mubr.f32.mxu0 %v331
    %958 = vmatmul.mubr.f32.gmra.mrb[0].mxu0 %v330
    %v959 = vpop.f32.mrb[0].mxu0
    %v960 = vadd.f32 %v871, %v959
    %v961 = vpop.f32.mrb[0].mxu0
    %v962 = vadd.f32 %v873, %v961
    %963 = vmatprep.mubr.f32.mxu0 %v335
    %964 = vmatmul.mubr.f32.gmra.mrb[0].mxu0 %v334
    %v965 = vpop.f32.mrb[0].mxu0
    %v966 = vadd.f32 %v877, %v965
    %v967 = vpop.f32.mrb[0].mxu0
    %v968 = vadd.f32 %v879, %v967
    %969 = vdwg.mxu0
    %v970 = vtanh.pop %v770
    %v971 = vtanh.pop %v772
    %v972 = vtanh.pop %v776
    %v973 = vtanh.pop %v778
    %v974 = vtanh.pop %v782
    %v975 = vtanh.pop %v784
    %v976 = vtanh.pop %v788
    %v977 = vtanh.pop %v790
    %v978 = vxor.u32 %v948, 2147483648
    %v979 = vxor.u32 %v950, 2147483648
    %v980 = vxor.u32 %v954, 2147483648
    %v981 = vxor.u32 %v956, 2147483648
    %v982 = vxor.u32 %v960, 2147483648
    %v983 = vxor.u32 %v962, 2147483648
    %v984 = vxor.u32 %v966, 2147483648
    %v985 = vxor.u32 %v968, 2147483648
    %v986 = vmul.f32 %v978, 1.442695
    %v987 = vpow.pop %v986
    %v988 = vmul.f32 %v979, 1.442695
    %v989 = vpow.pop %v988
    %v990 = vmul.f32 %v980, 1.442695
    %v991 = vpow.pop %v990
    %v992 = vmul.f32 %v981, 1.442695
    %v993 = vpow.pop %v992
    %v994 = vmul.f32 %v982, 1.442695
    %v995 = vpow.pop %v994
    %v996 = vmul.f32 %v983, 1.442695
    %v997 = vpow.pop %v996
    %v998 = vmul.f32 %v984, 1.442695
    %v999 = vpow.pop %v998
    %v1000 = vmul.f32 %v985, 1.442695
    %v1001 = vpow.pop %v1000
    %v1002 = vadd.f32 %v987, 1.0
    %v1003 = vadd.f32 %v989, 1.0
    %v1004 = vadd.f32 %v991, 1.0
    %v1005 = vadd.f32 %v993, 1.0
    %v1006 = vadd.f32 %v995, 1.0
    %v1007 = vadd.f32 %v997, 1.0
    %v1008 = vadd.f32 %v999, 1.0
    %v1009 = vadd.f32 %v1001, 1.0
    %v1010 = vrcp.pop %v1002
    %v1011 = vmul.f32 1.0, %v1010
    %v1012 = vrcp.pop %v1003
    %v1013 = vmul.f32 1.0, %v1012
    %v1014 = vrcp.pop %v1004
    %v1015 = vmul.f32 1.0, %v1014
    %v1016 = vrcp.pop %v1005
    %v1017 = vmul.f32 1.0, %v1016
    %v1018 = vrcp.pop %v1006
    %v1019 = vmul.f32 1.0, %v1018
    %v1020 = vrcp.pop %v1007
    %v1021 = vmul.f32 1.0, %v1020
    %v1022 = vrcp.pop %v1008
    %v1023 = vmul.f32 1.0, %v1022
    %v1024 = vrcp.pop %v1009
    %v1025 = vmul.f32 1.0, %v1024
    %v1026 = vmul.f32 %v970, %v1011
    %v1027 = vmul.f32 %v971, %v1013
    %v1028 = vmul.f32 %v972, %v1015
    %v1029 = vmul.f32 %v973, %v1017
    %v1030 = vmul.f32 %v974, %v1019
    %v1031 = vmul.f32 %v975, %v1021
    %v1032 = vmul.f32 %v976, %v1023
    %v1033 = vmul.f32 %v977, %v1025
    %v1034 = vld [vmem:[%s6] sm:$0xff]
    %v1035 = vld [vmem:[%s6 + $0x8] sm:$0xff]
    %v1036 = vld [vmem:[%s6 + $0x10] sm:$0xff]
    %v1037 = vld [vmem:[%s6 + $0x18] sm:$0xff]
    %v1038 = vld [vmem:[%s6 + $0x20] sm:$0xff]
    %v1039 = vld [vmem:[%s6 + $0x28] sm:$0xff]
    %v1040 = vld [vmem:[%s6 + $0x30] sm:$0xff]
    %v1041 = vld [vmem:[%s6 + $0x38] sm:$0xff]
    %v1042 = vld [vmem:[%s6 + $0x40] sm:$0xff]
    %v1043 = vld [vmem:[%s6 + $0x48] sm:$0xff]
    %v1044 = vld [vmem:[%s6 + $0x50] sm:$0xff]
    %v1045 = vld [vmem:[%s6 + $0x58] sm:$0xff]
    %v1046 = vld [vmem:[%s6 + $0x60] sm:$0xff]
    %v1047 = vld [vmem:[%s6 + $0x68] sm:$0xff]
    %v1048 = vld [vmem:[%s6 + $0x70] sm:$0xff]
    %v1049 = vld [vmem:[%s6 + $0x78] sm:$0xff]
    %v1050 = vld [vmem:[%s6 + $0x80] sm:$0xff]
    %v1051 = vld [vmem:[%s6 + $0x88] sm:$0xff]
    %v1052 = vld [vmem:[%s6 + $0x90] sm:$0xff]
    %v1053 = vld [vmem:[%s6 + $0x98] sm:$0xff]
    %v1054 = vld [vmem:[%s6 + $0xa0] sm:$0xff]
    %v1055 = vld [vmem:[%s6 + $0xa8] sm:$0xff]
    %v1056 = vld [vmem:[%s6 + $0xb0] sm:$0xff]
    %v1057 = vld [vmem:[%s6 + $0xb8] sm:$0xff]
    %v1058 = vld [vmem:[%s6 + $0xc0] sm:$0xff]
    %v1059 = vld [vmem:[%s6 + $0xc8] sm:$0xff]
    %v1060 = vld [vmem:[%s6 + $0xd0] sm:$0xff]
    %v1061 = vld [vmem:[%s6 + $0xd8] sm:$0xff]
    %v1062 = vld [vmem:[%s6 + $0xe0] sm:$0xff]
    %v1063 = vld [vmem:[%s6 + $0xe8] sm:$0xff]
    %v1064 = vld [vmem:[%s6 + $0xf0] sm:$0xff]
    %v1065 = vld [vmem:[%s6 + $0xf8] sm:$0xff]
    %v1066 = vld [vmem:[#allocation2] sm:$0x1]
    %v1068 = vlaneseq
    %v1069 = vshrl.u32 %v1068, 7
    %v1070 = vsub.s32 0, %v1069
    %v1071 = vrot.slane %v1066, %v1070
    %1073 = vmatprep.subr.mxu0 0.0
    %1074 = vmatpush1.msra.mxu0 %v1034
    %1075 = vmatprep.subr.mxu0 0.0
    %1076 = vmatpush1.msra.mxu0 %v1035
    %1077 = vmatprep.subr.mxu0 0.0
    %1078 = vmatpush1.msra.mxu0 %v1036
    %1079 = vmatprep.subr.mxu0 0.0
    %1080 = vmatpush1.msra.mxu0 %v1037
    %1081 = vmatprep.subr.mxu0 0.0
    %1082 = vmatpush1.msra.mxu0 %v1038
    %1083 = vmatprep.subr.mxu0 0.0
    %1084 = vmatpush1.msra.mxu0 %v1039
    %1085 = vmatprep.subr.mxu0 0.0
    %1086 = vmatpush1.msra.mxu0 %v1040
    %1087 = vmatprep.subr.mxu0 0.0
    %1088 = vmatpush1.msra.mxu0 %v1041
    %1089 = vmatprep.subr.mxu0 0.0
    %1090 = vmatpush1.msra.mxu0 %v1042
    %1091 = vmatprep.subr.mxu0 0.0
    %1092 = vmatpush1.msra.mxu0 %v1043
    %1093 = vmatprep.subr.mxu0 0.0
    %1094 = vmatpush1.msra.mxu0 %v1044
    %1095 = vmatprep.subr.mxu0 0.0
    %1096 = vmatpush1.msra.mxu0 %v1045
    %1097 = vmatprep.subr.mxu0 0.0
    %1098 = vmatpush1.msra.mxu0 %v1046
    %1099 = vmatprep.subr.mxu0 0.0
    %1100 = vmatpush1.msra.mxu0 %v1047
    %1101 = vmatprep.subr.mxu0 0.0
    %1102 = vmatpush1.msra.mxu0 %v1048
    %1103 = vmatprep.subr.mxu0 0.0
    %1104 = vmatpush1.msra.mxu0 %v1049
    %1105 = vmatprep.subr.mxu0 0.0
    %1106 = vmatpush1.msra.mxu0 %v1050
    %1107 = vmatprep.subr.mxu0 0.0
    %1108 = vmatpush1.msra.mxu0 %v1051
    %1109 = vmatprep.subr.mxu0 0.0
    %1110 = vmatpush1.msra.mxu0 %v1052
    %1111 = vmatprep.subr.mxu0 0.0
    %1112 = vmatpush1.msra.mxu0 %v1053
    %1113 = vmatprep.subr.mxu0 0.0
    %1114 = vmatpush1.msra.mxu0 %v1054
    %1115 = vmatprep.subr.mxu0 0.0
    %1116 = vmatpush1.msra.mxu0 %v1055
    %1117 = vmatprep.subr.mxu0 0.0
    %1118 = vmatpush1.msra.mxu0 %v1056
    %1119 = vmatprep.subr.mxu0 0.0
    %1120 = vmatpush1.msra.mxu0 %v1057
    %1121 = vmatprep.subr.mxu0 0.0
    %1122 = vmatpush1.msra.mxu0 %v1058
    %1123 = vmatprep.subr.mxu0 0.0
    %1124 = vmatpush1.msra.mxu0 %v1059
    %1125 = vmatprep.subr.mxu0 0.0
    %1126 = vmatpush1.msra.mxu0 %v1060
    %1127 = vmatprep.subr.mxu0 0.0
    %1128 = vmatpush1.msra.mxu0 %v1061
    %1129 = vmatprep.subr.mxu0 0.0
    %1130 = vmatpush1.msra.mxu0 %v1062
    %1131 = vmatprep.subr.mxu0 0.0
    %1132 = vmatpush1.msra.mxu0 %v1063
    %1133 = vmatprep.subr.mxu0 0.0
    %1134 = vmatpush1.msra.mxu0 %v1064
    %1135 = vmatprep.subr.mxu0 0.0
    %1136 = vmatpush1.msra.mxu0 %v1065
    %1137 = vmatprep.mubr.f32.mxu0 %v1027
    %1138 = vmatmul.mubr.f32.gmra.mrb[0].mxu0 %v1026
    %v1139 = vpop.f32.mrb[0].mxu0
    %v1140 = vadd.f32 %v1071, %v1139
    %v1141 = vpop.f32.mrb[0].mxu0
    %1142 = vmatprep.mubr.f32.mxu0 %v1029
    %1143 = vmatmul.mubr.f32.gmra.mrb[0].mxu0 %v1028
    %v1144 = vpop.f32.mrb[0].mxu0
    %v1145 = vadd.f32 %v1071, %v1144
    %v1146 = vpop.f32.mrb[0].mxu0
    %1147 = vmatprep.mubr.f32.mxu0 %v1031
    %1148 = vmatmul.mubr.f32.gmra.mrb[0].mxu0 %v1030
    %v1149 = vpop.f32.mrb[0].mxu0
    %v1150 = vadd.f32 %v1071, %v1149
    %v1151 = vpop.f32.mrb[0].mxu0
    %1152 = vmatprep.mubr.f32.mxu0 %v1033
    %1153 = vmatmul.mubr.f32.gmra.mrb[0].mxu0 %v1032
    %v1154 = vpop.f32.mrb[0].mxu0
    %v1155 = vadd.f32 %v1071, %v1154
    %v1156 = vpop.f32.mrb[0].mxu0
    %1157 = vdwg.mxu0
    %v1158 = vld [vmem:[%s1] sm:$0x3]
    %vm1159 = vcmp.gt.f32.partialorder %v1158, 0.5
    %1164 = vset.pattern.permute.xlu0 0
    %1165 = vperm.xlu0 %1164, %v1140
    %v1166 = vpop.permute.xlu0 %1165
    %1167 = vset.pattern.permute.xlu0 0
    %1168 = vperm.xlu0 %1167, %v1145
    %v1169 = vpop.permute.xlu0 %1168
    %1170 = vset.pattern.permute.xlu0 0
    %1171 = vperm.xlu0 %1170, %v1150
    %v1172 = vpop.permute.xlu0 %1171
    %1173 = vset.pattern.permute.xlu0 0
    %1174 = vperm.xlu0 %1173, %v1155
    %v1175 = vpop.permute.xlu0 %1174
    %v1176 = vlaneseq
    %v1177 = vand.u32 %v1176, 127
    %v1178 = vlaneseq
    %v1179 = vshrl.u32 %v1178, 7
    %v1180 = vsub.s32 %v1177, %v1179
    %v1181 = vrot.slane %v1166, %v1180
    %v1182 = vadd.s32 %v1177, 4294967288
    %v1183 = vlaneseq
    %v1184 = vshrl.u32 %v1183, 7
    %v1185 = vsub.s32 %v1182, %v1184
    %v1186 = vrot.slane %v1169, %v1185
    %vm1187 = vcmask 130112
    %v1188 = vsel %vm1187, %v1186, %v1181
    %v1189 = vlaneseq
    %v1190 = vshrl.u32 %v1189, 7
    %v1191 = vsub.s32 %v1177, %v1190
    %v1192 = vrot.slane %v1172, %v1191
    %v1193 = vlaneseq
    %v1194 = vshrl.u32 %v1193, 7
    %v1195 = vsub.s32 %v1182, %v1194
    %v1196 = vrot.slane %v1175, %v1195
    %v1197 = vsel %vm1187, %v1196, %v1192
    %vm1198 = vcmask 1041409
    %v1199 = vsel %vm1198, %v1197, %v1188
    %v1201 = vsel %vm1159, %v1199, -1e+10
    %vm1202 = vcmask 123904
    %v1203 = vsel %vm1202, %v1201, -inf
    %1204 = vmax.xlane.f32.xlu0 %v1203
    %v1205 = vpop.xlane.xlu0 %1204
    %v1206 = vsub.f32 %v1201, %v1205
    %v1207 = vmul.f32 %v1206, 1.442695
    %v1208 = vpow.pop %v1207
    %v1209 = vsel %vm1202, %v1208, 0.0
    %1210 = vadd.xlane.f32.xlu0 %v1209
    %v1211 = vpop.xlane.xlu0 %1210
    %v1212 = vrcp.pop %v1211
    %v1213 = vmul.f32 %v1208, %v1212
    %v1216 = vunpack.c.l.s4 1966171168
    %v1217 = vunpack.c.0.s8 %v1216
    %v1218 = vlaneseq
    %v1219 = vshrl.u32 %v1218, 7
    %v1220 = vsub.s32 %v1217, %v1219
    %v1221 = vrot.slane %v1213, %v1220
    %v1222 = vcombine.high %v1221, %v1221
    %v1224 = vunpack.c.l.s4 1966171168
    %v1225 = vunpack.c.0.s8 %v1224
    %v1226 = vlaneseq
    %v1227 = vshrl.u32 %v1226, 7
    %v1228 = vsub.s32 %v1225, %v1227
    %v1229 = vrot.slane %v1221, %v1228
    %v1231 = vunpack.c.l.s4 1966171168
    %v1232 = vunpack.c.0.s8 %v1231
    %v1233 = vlaneseq
    %v1234 = vshrl.u32 %v1233, 7
    %v1235 = vsub.s32 %v1232, %v1234
    %v1236 = vrot.slane %v1222, %v1235
    %vm1237 = vcmask 130048
    %v1238 = vsel %vm1237, %v1229, 0
    %1240 = vmatprep.subr.mxu0 %v321
    %1241 = vmatpush1.msra.mxu0 %v320
    %1242 = vmatprep.subr.mxu0 %v325
    %1243 = vmatpush1.msra.mxu0 %v324
    %1244 = vmatprep.subr.mxu0 0.0
    %1245 = vmatpush1.msra.mxu0 0.0
    %1246 = vmatprep.subr.mxu0 0.0
    %1247 = vmatpush1.msra.mxu0 0.0
    %1248 = vmatprep.subr.mxu0 0.0
    %1249 = vmatpush1.msra.mxu0 0.0
    %1250 = vmatprep.subr.mxu0 0.0
    %1251 = vmatpush1.msra.mxu0 0.0
    %1252 = vmatprep.subr.mxu0 0.0
    %1253 = vmatpush1.msra.mxu0 0.0
    %1254 = vmatprep.subr.mxu0 0.0
    %1255 = vmatpush1.msra.mxu0 0.0
    %1256 = vmatprep.subr.mxu0 0.0
    %1257 = vmatpush1.msra.mxu0 0.0
    %1258 = vmatprep.subr.mxu0 0.0
    %1259 = vmatpush1.msra.mxu0 0.0
    %1260 = vmatprep.subr.mxu0 0.0
    %1261 = vmatpush1.msra.mxu0 0.0
    %1262 = vmatprep.subr.mxu0 0.0
    %1263 = vmatpush1.msra.mxu0 0.0
    %1264 = vmatprep.subr.mxu0 0.0
    %1265 = vmatpush1.msra.mxu0 0.0
    %1266 = vmatprep.subr.mxu0 0.0
    %1267 = vmatpush1.msra.mxu0 0.0
    %1268 = vmatprep.subr.mxu0 0.0
    %1269 = vmatpush1.msra.mxu0 0.0
    %1270 = vmatprep.subr.mxu0 0.0
    %1271 = vmatpush1.msra.mxu0 0.0
    %1272 = vmatprep.subr.mxu0 0.0
    %1273 = vmatpush1.msra.mxu0 0.0
    %1274 = vmatprep.subr.mxu0 0.0
    %1275 = vmatpush1.msra.mxu0 0.0
    %1276 = vmatprep.subr.mxu0 0.0
    %1277 = vmatpush1.msra.mxu0 0.0
    %1278 = vmatprep.subr.mxu0 0.0
    %1279 = vmatpush1.msra.mxu0 0.0
    %1280 = vmatprep.subr.mxu0 0.0
    %1281 = vmatpush1.msra.mxu0 0.0
    %1282 = vmatprep.subr.mxu0 0.0
    %1283 = vmatpush1.msra.mxu0 0.0
    %1284 = vmatprep.subr.mxu0 0.0
    %1285 = vmatpush1.msra.mxu0 0.0
    %1286 = vmatprep.subr.mxu0 0.0
    %1287 = vmatpush1.msra.mxu0 0.0
    %1288 = vmatprep.subr.mxu0 0.0
    %1289 = vmatpush1.msra.mxu0 0.0
    %1290 = vmatprep.subr.mxu0 0.0
    %1291 = vmatpush1.msra.mxu0 0.0
    %1292 = vmatprep.subr.mxu0 0.0
    %1293 = vmatpush1.msra.mxu0 0.0
    %1294 = vmatprep.subr.mxu0 0.0
    %1295 = vmatpush1.msra.mxu0 0.0
    %1296 = vmatprep.subr.mxu0 0.0
    %1297 = vmatpush1.msra.mxu0 0.0
    %1298 = vmatprep.subr.mxu0 0.0
    %1299 = vmatpush1.msra.mxu0 0.0
    %1300 = vmatprep.subr.mxu0 0.0
    %1301 = vmatpush1.msra.mxu0 0.0
    %1302 = vmatprep.subr.mxu0 0.0
    %1303 = vmatpush1.msra.mxu0 0.0
    %1304 = vmatprep.mubr.f32.mxu0 0.0
    %1305 = vmatmul.mubr.f32.gmra.mrb[0].mxu0 %v1238
    %v1306 = vpop.f32.mrb[0].mxu0
    %v1307 = vadd.f32 0.0, %v1306
    %v1308 = vpop.f32.mrb[0].mxu0
    %v1309 = vadd.f32 0.0, %v1308
    %1310 = vdwg.mxu0
    %1311 = vmatprep.subr.mxu0 %v323
    %1312 = vmatpush1.msra.mxu0 %v322
    %1313 = vmatprep.subr.mxu0 %v327
    %1314 = vmatpush1.msra.mxu0 %v326
    %1315 = vmatprep.subr.mxu0 0.0
    %1316 = vmatpush1.msra.mxu0 0.0
    %1317 = vmatprep.subr.mxu0 0.0
    %1318 = vmatpush1.msra.mxu0 0.0
    %1319 = vmatprep.subr.mxu0 0.0
    %1320 = vmatpush1.msra.mxu0 0.0
    %1321 = vmatprep.subr.mxu0 0.0
    %1322 = vmatpush1.msra.mxu0 0.0
    %1323 = vmatprep.subr.mxu0 0.0
    %1324 = vmatpush1.msra.mxu0 0.0
    %1325 = vmatprep.subr.mxu0 0.0
    %1326 = vmatpush1.msra.mxu0 0.0
    %1327 = vmatprep.subr.mxu0 0.0
    %1328 = vmatpush1.msra.mxu0 0.0
    %1329 = vmatprep.subr.mxu0 0.0
    %1330 = vmatpush1.msra.mxu0 0.0
    %1331 = vmatprep.subr.mxu0 0.0
    %1332 = vmatpush1.msra.mxu0 0.0
    %1333 = vmatprep.subr.mxu0 0.0
    %1334 = vmatpush1.msra.mxu0 0.0
    %1335 = vmatprep.subr.mxu0 0.0
    %1336 = vmatpush1.msra.mxu0 0.0
    %1337 = vmatprep.subr.mxu0 0.0
    %1338 = vmatpush1.msra.mxu0 0.0
    %1339 = vmatprep.subr.mxu0 0.0
    %1340 = vmatpush1.msra.mxu0 0.0
    %1341 = vmatprep.subr.mxu0 0.0
    %1342 = vmatpush1.msra.mxu0 0.0
    %1343 = vmatprep.subr.mxu0 0.0
    %1344 = vmatpush1.msra.mxu0 0.0
    %1345 = vmatprep.subr.mxu0 0.0
    %1346 = vmatpush1.msra.mxu0 0.0
    %1347 = vmatprep.subr.mxu0 0.0
    %1348 = vmatpush1.msra.mxu0 0.0
    %1349 = vmatprep.subr.mxu0 0.0
    %1350 = vmatpush1.msra.mxu0 0.0
    %1351 = vmatprep.subr.mxu0 0.0
    %1352 = vmatpush1.msra.mxu0 0.0
    %1353 = vmatprep.subr.mxu0 0.0
    %1354 = vmatpush1.msra.mxu0 0.0
    %1355 = vmatprep.subr.mxu0 0.0
    %1356 = vmatpush1.msra.mxu0 0.0
    %1357 = vmatprep.subr.mxu0 0.0
    %1358 = vmatpush1.msra.mxu0 0.0
    %1359 = vmatprep.subr.mxu0 0.0
    %1360 = vmatpush1.msra.mxu0 0.0
    %1361 = vmatprep.subr.mxu0 0.0
    %1362 = vmatpush1.msra.mxu0 0.0
    %1363 = vmatprep.subr.mxu0 0.0
    %1364 = vmatpush1.msra.mxu0 0.0
    %1365 = vmatprep.subr.mxu0 0.0
    %1366 = vmatpush1.msra.mxu0 0.0
    %1367 = vmatprep.subr.mxu0 0.0
    %1368 = vmatpush1.msra.mxu0 0.0
    %1369 = vmatprep.subr.mxu0 0.0
    %1370 = vmatpush1.msra.mxu0 0.0
    %1371 = vmatprep.subr.mxu0 0.0
    %1372 = vmatpush1.msra.mxu0 0.0
    %1373 = vmatprep.subr.mxu0 0.0
    %1374 = vmatpush1.msra.mxu0 0.0
    %1375 = vmatprep.mubr.f32.mxu0 0.0
    %1376 = vmatmul.mubr.f32.gmra.mrb[0].mxu0 %v1238
    %v1377 = vpop.f32.mrb[0].mxu0
    %v1378 = vadd.f32 0.0, %v1377
    %v1379 = vpop.f32.mrb[0].mxu0
    %v1380 = vadd.f32 0.0, %v1379
    %1381 = vdwg.mxu0
    %v1382 = vsel %vm1237, %v1236, 0
    %1384 = vmatprep.subr.mxu0 %v329
    %1385 = vmatpush1.msra.mxu0 %v328
    %1386 = vmatprep.subr.mxu0 %v333
    %1387 = vmatpush1.msra.mxu0 %v332
    %1388 = vmatprep.subr.mxu0 0.0
    %1389 = vmatpush1.msra.mxu0 0.0
    %1390 = vmatprep.subr.mxu0 0.0
    %1391 = vmatpush1.msra.mxu0 0.0
    %1392 = vmatprep.subr.mxu0 0.0
    %1393 = vmatpush1.msra.mxu0 0.0
    %1394 = vmatprep.subr.mxu0 0.0
    %1395 = vmatpush1.msra.mxu0 0.0
    %1396 = vmatprep.subr.mxu0 0.0
    %1397 = vmatpush1.msra.mxu0 0.0
    %1398 = vmatprep.subr.mxu0 0.0
    %1399 = vmatpush1.msra.mxu0 0.0
    %1400 = vmatprep.subr.mxu0 0.0
    %1401 = vmatpush1.msra.mxu0 0.0
    %1402 = vmatprep.subr.mxu0 0.0
    %1403 = vmatpush1.msra.mxu0 0.0
    %1404 = vmatprep.subr.mxu0 0.0
    %1405 = vmatpush1.msra.mxu0 0.0
    %1406 = vmatprep.subr.mxu0 0.0
    %1407 = vmatpush1.msra.mxu0 0.0
    %1408 = vmatprep.subr.mxu0 0.0
    %1409 = vmatpush1.msra.mxu0 0.0
    %1410 = vmatprep.subr.mxu0 0.0
    %1411 = vmatpush1.msra.mxu0 0.0
    %1412 = vmatprep.subr.mxu0 0.0
    %1413 = vmatpush1.msra.mxu0 0.0
    %1414 = vmatprep.subr.mxu0 0.0
    %1415 = vmatpush1.msra.mxu0 0.0
    %1416 = vmatprep.subr.mxu0 0.0
    %1417 = vmatpush1.msra.mxu0 0.0
    %1418 = vmatprep.subr.mxu0 0.0
    %1419 = vmatpush1.msra.mxu0 0.0
    %1420 = vmatprep.subr.mxu0 0.0
    %1421 = vmatpush1.msra.mxu0 0.0
    %1422 = vmatprep.subr.mxu0 0.0
    %1423 = vmatpush1.msra.mxu0 0.0
    %1424 = vmatprep.subr.mxu0 0.0
    %1425 = vmatpush1.msra.mxu0 0.0
    %1426 = vmatprep.subr.mxu0 0.0
    %1427 = vmatpush1.msra.mxu0 0.0
    %1428 = vmatprep.subr.mxu0 0.0
    %1429 = vmatpush1.msra.mxu0 0.0
    %1430 = vmatprep.subr.mxu0 0.0
    %1431 = vmatpush1.msra.mxu0 0.0
    %1432 = vmatprep.subr.mxu0 0.0
    %1433 = vmatpush1.msra.mxu0 0.0
    %1434 = vmatprep.subr.mxu0 0.0
    %1435 = vmatpush1.msra.mxu0 0.0
    %1436 = vmatprep.subr.mxu0 0.0
    %1437 = vmatpush1.msra.mxu0 0.0
    %1438 = vmatprep.subr.mxu0 0.0
    %1439 = vmatpush1.msra.mxu0 0.0
    %1440 = vmatprep.subr.mxu0 0.0
    %1441 = vmatpush1.msra.mxu0 0.0
    %1442 = vmatprep.subr.mxu0 0.0
    %1443 = vmatpush1.msra.mxu0 0.0
    %1444 = vmatprep.subr.mxu0 0.0
    %1445 = vmatpush1.msra.mxu0 0.0
    %1446 = vmatprep.subr.mxu0 0.0
    %1447 = vmatpush1.msra.mxu0 0.0
    %1448 = vmatprep.mubr.f32.mxu0 0.0
    %1449 = vmatmul.mubr.f32.gmra.mrb[0].mxu0 %v1382
    %v1450 = vpop.f32.mrb[0].mxu0
    %v1451 = vadd.f32 0.0, %v1450
    %v1452 = vpop.f32.mrb[0].mxu0
    %v1453 = vadd.f32 0.0, %v1452
    %1454 = vdwg.mxu0
    %1455 = vmatprep.subr.mxu0 %v331
    %1456 = vmatpush1.msra.mxu0 %v330
    %1457 = vmatprep.subr.mxu0 %v335
    %1458 = vmatpush1.msra.mxu0 %v334
    %1459 = vmatprep.subr.mxu0 0.0
    %1460 = vmatpush1.msra.mxu0 0.0
    %1461 = vmatprep.subr.mxu0 0.0
    %1462 = vmatpush1.msra.mxu0 0.0
    %1463 = vmatprep.subr.mxu0 0.0
    %1464 = vmatpush1.msra.mxu0 0.0
    %1465 = vmatprep.subr.mxu0 0.0
    %1466 = vmatpush1.msra.mxu0 0.0
    %1467 = vmatprep.subr.mxu0 0.0
    %1468 = vmatpush1.msra.mxu0 0.0
    %1469 = vmatprep.subr.mxu0 0.0
    %1470 = vmatpush1.msra.mxu0 0.0
    %1471 = vmatprep.subr.mxu0 0.0
    %1472 = vmatpush1.msra.mxu0 0.0
    %1473 = vmatprep.subr.mxu0 0.0
    %1474 = vmatpush1.msra.mxu0 0.0
    %1475 = vmatprep.subr.mxu0 0.0
    %1476 = vmatpush1.msra.mxu0 0.0
    %1477 = vmatprep.subr.mxu0 0.0
    %1478 = vmatpush1.msra.mxu0 0.0
    %1479 = vmatprep.subr.mxu0 0.0
    %1480 = vmatpush1.msra.mxu0 0.0
    %1481 = vmatprep.subr.mxu0 0.0
    %1482 = vmatpush1.msra.mxu0 0.0
    %1483 = vmatprep.subr.mxu0 0.0
    %1484 = vmatpush1.msra.mxu0 0.0
    %1485 = vmatprep.subr.mxu0 0.0
    %1486 = vmatpush1.msra.mxu0 0.0
    %1487 = vmatprep.subr.mxu0 0.0
    %1488 = vmatpush1.msra.mxu0 0.0
    %1489 = vmatprep.subr.mxu0 0.0
    %1490 = vmatpush1.msra.mxu0 0.0
    %1491 = vmatprep.subr.mxu0 0.0
    %1492 = vmatpush1.msra.mxu0 0.0
    %1493 = vmatprep.subr.mxu0 0.0
    %1494 = vmatpush1.msra.mxu0 0.0
    %1495 = vmatprep.subr.mxu0 0.0
    %1496 = vmatpush1.msra.mxu0 0.0
    %1497 = vmatprep.subr.mxu0 0.0
    %1498 = vmatpush1.msra.mxu0 0.0
    %1499 = vmatprep.subr.mxu0 0.0
    %1500 = vmatpush1.msra.mxu0 0.0
    %1501 = vmatprep.subr.mxu0 0.0
    %1502 = vmatpush1.msra.mxu0 0.0
    %1503 = vmatprep.subr.mxu0 0.0
    %1504 = vmatpush1.msra.mxu0 0.0
    %1505 = vmatprep.subr.mxu0 0.0
    %1506 = vmatpush1.msra.mxu0 0.0
    %1507 = vmatprep.subr.mxu0 0.0
    %1508 = vmatpush1.msra.mxu0 0.0
    %1509 = vmatprep.subr.mxu0 0.0
    %1510 = vmatpush1.msra.mxu0 0.0
    %1511 = vmatprep.subr.mxu0 0.0
    %1512 = vmatpush1.msra.mxu0 0.0
    %1513 = vmatprep.subr.mxu0 0.0
    %1514 = vmatpush1.msra.mxu0 0.0
    %1515 = vmatprep.subr.mxu0 0.0
    %1516 = vmatpush1.msra.mxu0 0.0
    %1517 = vmatprep.subr.mxu0 0.0
    %1518 = vmatpush1.msra.mxu0 0.0
    %1519 = vmatprep.mubr.f32.mxu0 0.0
    %1520 = vmatmul.mubr.f32.gmra.mrb[0].mxu0 %v1382
    %v1521 = vpop.f32.mrb[0].mxu0
    %v1522 = vadd.f32 0.0, %v1521
    %v1523 = vpop.f32.mrb[0].mxu0
    %v1524 = vadd.f32 0.0, %v1523
    %1525 = vdwg.mxu0
    %v1526 = vld [vmem:[%s8] sm:$0xff]
    %v1527 = vld [vmem:[%s8 + $0x8] sm:$0xff]
    %v1528 = vld [vmem:[%s8 + $0x10] sm:$0xff]
    %v1529 = vld [vmem:[%s8 + $0x18] sm:$0xff]
    %v1530 = vld [vmem:[%s8 + $0x20] sm:$0xff]
    %v1531 = vld [vmem:[%s8 + $0x28] sm:$0xff]
    %v1532 = vld [vmem:[%s8 + $0x30] sm:$0xff]
    %v1533 = vld [vmem:[%s8 + $0x38] sm:$0xff]
    %v1534 = vld [vmem:[%s8 + $0x40] sm:$0xff]
    %v1535 = vld [vmem:[%s8 + $0x48] sm:$0xff]
    %v1536 = vld [vmem:[%s8 + $0x50] sm:$0xff]
    %v1537 = vld [vmem:[%s8 + $0x58] sm:$0xff]
    %v1538 = vld [vmem:[%s8 + $0x60] sm:$0xff]
    %v1539 = vld [vmem:[%s8 + $0x68] sm:$0xff]
    %v1540 = vld [vmem:[%s8 + $0x70] sm:$0xff]
    %v1541 = vld [vmem:[%s8 + $0x78] sm:$0xff]
    %v1542 = vld [vmem:[%s8 + $0x80] sm:$0xff]
    %v1543 = vld [vmem:[%s8 + $0x88] sm:$0xff]
    %v1544 = vld [vmem:[%s8 + $0x90] sm:$0xff]
    %v1545 = vld [vmem:[%s8 + $0x98] sm:$0xff]
    %v1546 = vld [vmem:[%s8 + $0xa0] sm:$0xff]
    %v1547 = vld [vmem:[%s8 + $0xa8] sm:$0xff]
    %v1548 = vld [vmem:[%s8 + $0xb0] sm:$0xff]
    %v1549 = vld [vmem:[%s8 + $0xb8] sm:$0xff]
    %v1550 = vld [vmem:[%s8 + $0xc0] sm:$0xff]
    %v1551 = vld [vmem:[%s8 + $0xc8] sm:$0xff]
    %v1552 = vld [vmem:[%s8 + $0xd0] sm:$0xff]
    %v1553 = vld [vmem:[%s8 + $0xd8] sm:$0xff]
    %v1554 = vld [vmem:[%s8 + $0xe0] sm:$0xff]
    %v1555 = vld [vmem:[%s8 + $0xe8] sm:$0xff]
    %v1556 = vld [vmem:[%s8 + $0xf0] sm:$0xff]
    %v1557 = vld [vmem:[%s8 + $0xf8] sm:$0xff]
    %v1558 = vld [vmem:[%s8 + $0x100] sm:$0xff]
    %v1559 = vld [vmem:[%s8 + $0x108] sm:$0xff]
    %v1560 = vld [vmem:[%s8 + $0x110] sm:$0xff]
    %v1561 = vld [vmem:[%s8 + $0x118] sm:$0xff]
    %v1562 = vld [vmem:[%s8 + $0x120] sm:$0xff]
    %v1563 = vld [vmem:[%s8 + $0x128] sm:$0xff]
    %v1564 = vld [vmem:[%s8 + $0x130] sm:$0xff]
    %v1565 = vld [vmem:[%s8 + $0x138] sm:$0xff]
    %v1566 = vld [vmem:[%s8 + $0x140] sm:$0xff]
    %v1567 = vld [vmem:[%s8 + $0x148] sm:$0xff]
    %v1568 = vld [vmem:[%s8 + $0x150] sm:$0xff]
    %v1569 = vld [vmem:[%s8 + $0x158] sm:$0xff]
    %v1570 = vld [vmem:[%s8 + $0x160] sm:$0xff]
    %v1571 = vld [vmem:[%s8 + $0x168] sm:$0xff]
    %v1572 = vld [vmem:[%s8 + $0x170] sm:$0xff]
    %v1573 = vld [vmem:[%s8 + $0x178] sm:$0xff]
    %v1574 = vld [vmem:[%s8 + $0x180] sm:$0xff]
    %v1575 = vld [vmem:[%s8 + $0x188] sm:$0xff]
    %v1576 = vld [vmem:[%s8 + $0x190] sm:$0xff]
    %v1577 = vld [vmem:[%s8 + $0x198] sm:$0xff]
    %v1578 = vld [vmem:[%s8 + $0x1a0] sm:$0xff]
    %v1579 = vld [vmem:[%s8 + $0x1a8] sm:$0xff]
    %v1580 = vld [vmem:[%s8 + $0x1b0] sm:$0xff]
    %v1581 = vld [vmem:[%s8 + $0x1b8] sm:$0xff]
    %v1582 = vld [vmem:[%s8 + $0x1c0] sm:$0xff]
    %v1583 = vld [vmem:[%s8 + $0x1c8] sm:$0xff]
    %v1584 = vld [vmem:[%s8 + $0x1d0] sm:$0xff]
    %v1585 = vld [vmem:[%s8 + $0x1d8] sm:$0xff]
    %v1586 = vld [vmem:[%s8 + $0x1e0] sm:$0xff]
    %v1587 = vld [vmem:[%s8 + $0x1e8] sm:$0xff]
    %v1588 = vld [vmem:[%s8 + $0x1f0] sm:$0xff]
    %v1589 = vld [vmem:[%s8 + $0x1f8] sm:$0xff]
    %v1590 = vld [vmem:[%s9] sm:$0x1]
    %v1592 = vlaneseq
    %v1593 = vshrl.u32 %v1592, 7
    %v1594 = vsub.s32 0, %v1593
    %v1595 = vrot.slane %v1590, %v1594
    %v1605 = vrot.slane %v1451, 7
    %v1606 = vsel %vm1198, %v1605, %v1307
    %v1607 = vrot.slane %v1453, 7
    %v1608 = vsel %vm1198, %v1607, %v1309
    %v1609 = vrot.slane %v1522, 7
    %v1610 = vsel %vm1198, %v1609, %v1378
    %v1611 = vrot.slane %v1524, 7
    %v1612 = vsel %vm1198, %v1611, %v1380
    %1617 = vmatprep.subr.mxu0 0.0
    %1618 = vmatpush1.msra.mxu0 %v1526
    %1619 = vmatprep.subr.mxu0 0.0
    %1620 = vmatpush1.msra.mxu0 %v1527
    %1621 = vmatprep.subr.mxu0 0.0
    %1622 = vmatpush1.msra.mxu0 %v1528
    %1623 = vmatprep.subr.mxu0 0.0
    %1624 = vmatpush1.msra.mxu0 %v1529
    %1625 = vmatprep.subr.mxu0 0.0
    %1626 = vmatpush1.msra.mxu0 %v1530
    %1627 = vmatprep.subr.mxu0 0.0
    %1628 = vmatpush1.msra.mxu0 %v1531
    %1629 = vmatprep.subr.mxu0 0.0
    %1630 = vmatpush1.msra.mxu0 %v1532
    %1631 = vmatprep.subr.mxu0 0.0
    %1632 = vmatpush1.msra.mxu0 %v1533
    %1633 = vmatprep.subr.mxu0 0.0
    %1634 = vmatpush1.msra.mxu0 %v1534
    %1635 = vmatprep.subr.mxu0 0.0
    %1636 = vmatpush1.msra.mxu0 %v1535
    %1637 = vmatprep.subr.mxu0 0.0
    %1638 = vmatpush1.msra.mxu0 %v1536
    %1639 = vmatprep.subr.mxu0 0.0
    %1640 = vmatpush1.msra.mxu0 %v1537
    %1641 = vmatprep.subr.mxu0 0.0
    %1642 = vmatpush1.msra.mxu0 %v1538
    %1643 = vmatprep.subr.mxu0 0.0
    %1644 = vmatpush1.msra.mxu0 %v1539
    %1645 = vmatprep.subr.mxu0 0.0
    %1646 = vmatpush1.msra.mxu0 %v1540
    %1647 = vmatprep.subr.mxu0 0.0
    %1648 = vmatpush1.msra.mxu0 %v1541
    %1649 = vmatprep.subr.mxu0 0.0
    %1650 = vmatpush1.msra.mxu0 %v1542
    %1651 = vmatprep.subr.mxu0 0.0
    %1652 = vmatpush1.msra.mxu0 %v1543
    %1653 = vmatprep.subr.mxu0 0.0
    %1654 = vmatpush1.msra.mxu0 %v1544
    %1655 = vmatprep.subr.mxu0 0.0
    %1656 = vmatpush1.msra.mxu0 %v1545
    %1657 = vmatprep.subr.mxu0 0.0
    %1658 = vmatpush1.msra.mxu0 %v1546
    %1659 = vmatprep.subr.mxu0 0.0
    %1660 = vmatpush1.msra.mxu0 %v1547
    %1661 = vmatprep.subr.mxu0 0.0
    %1662 = vmatpush1.msra.mxu0 %v1548
    %1663 = vmatprep.subr.mxu0 0.0
    %1664 = vmatpush1.msra.mxu0 %v1549
    %1665 = vmatprep.subr.mxu0 0.0
    %1666 = vmatpush1.msra.mxu0 %v1550
    %1667 = vmatprep.subr.mxu0 0.0
    %1668 = vmatpush1.msra.mxu0 %v1551
    %1669 = vmatprep.subr.mxu0 0.0
    %1670 = vmatpush1.msra.mxu0 %v1552
    %1671 = vmatprep.subr.mxu0 0.0
    %1672 = vmatpush1.msra.mxu0 %v1553
    %1673 = vmatprep.subr.mxu0 0.0
    %1674 = vmatpush1.msra.mxu0 %v1554
    %1675 = vmatprep.subr.mxu0 0.0
    %1676 = vmatpush1.msra.mxu0 %v1555
    %1677 = vmatprep.subr.mxu0 0.0
    %1678 = vmatpush1.msra.mxu0 %v1556
    %1679 = vmatprep.subr.mxu0 0.0
    %1680 = vmatpush1.msra.mxu0 %v1557
    %1681 = vmatprep.mubr.f32.mxu0 %v1608
    %1682 = vmatmul.mubr.f32.gmra.mrb[0].mxu0 %v1606
    %v1683 = vpop.f32.mrb[0].mxu0
    %v1684 = vadd.f32 %v1595, %v1683
    %v1685 = vpop.f32.mrb[0].mxu0
    %1686 = vdwg.mxu0
    %1687 = vmatprep.subr.mxu0 0.0
    %1688 = vmatpush1.msra.mxu0 %v1558
    %1689 = vmatprep.subr.mxu0 0.0
    %1690 = vmatpush1.msra.mxu0 %v1559
    %1691 = vmatprep.subr.mxu0 0.0
    %1692 = vmatpush1.msra.mxu0 %v1560
    %1693 = vmatprep.subr.mxu0 0.0
    %1694 = vmatpush1.msra.mxu0 %v1561
    %1695 = vmatprep.subr.mxu0 0.0
    %1696 = vmatpush1.msra.mxu0 %v1562
    %1697 = vmatprep.subr.mxu0 0.0
    %1698 = vmatpush1.msra.mxu0 %v1563
    %1699 = vmatprep.subr.mxu0 0.0
    %1700 = vmatpush1.msra.mxu0 %v1564
    %1701 = vmatprep.subr.mxu0 0.0
    %1702 = vmatpush1.msra.mxu0 %v1565
    %1703 = vmatprep.subr.mxu0 0.0
    %1704 = vmatpush1.msra.mxu0 %v1566
    %1705 = vmatprep.subr.mxu0 0.0
    %1706 = vmatpush1.msra.mxu0 %v1567
    %1707 = vmatprep.subr.mxu0 0.0
    %1708 = vmatpush1.msra.mxu0 %v1568
    %1709 = vmatprep.subr.mxu0 0.0
    %1710 = vmatpush1.msra.mxu0 %v1569
    %1711 = vmatprep.subr.mxu0 0.0
    %1712 = vmatpush1.msra.mxu0 %v1570
    %1713 = vmatprep.subr.mxu0 0.0
    %1714 = vmatpush1.msra.mxu0 %v1571
    %1715 = vmatprep.subr.mxu0 0.0
    %1716 = vmatpush1.msra.mxu0 %v1572
    %1717 = vmatprep.subr.mxu0 0.0
    %1718 = vmatpush1.msra.mxu0 %v1573
    %1719 = vmatprep.subr.mxu0 0.0
    %1720 = vmatpush1.msra.mxu0 %v1574
    %1721 = vmatprep.subr.mxu0 0.0
    %1722 = vmatpush1.msra.mxu0 %v1575
    %1723 = vmatprep.subr.mxu0 0.0
    %1724 = vmatpush1.msra.mxu0 %v1576
    %1725 = vmatprep.subr.mxu0 0.0
    %1726 = vmatpush1.msra.mxu0 %v1577
    %1727 = vmatprep.subr.mxu0 0.0
    %1728 = vmatpush1.msra.mxu0 %v1578
    %1729 = vmatprep.subr.mxu0 0.0
    %1730 = vmatpush1.msra.mxu0 %v1579
    %1731 = vmatprep.subr.mxu0 0.0
    %1732 = vmatpush1.msra.mxu0 %v1580
    %1733 = vmatprep.subr.mxu0 0.0
    %1734 = vmatpush1.msra.mxu0 %v1581
    %1735 = vmatprep.subr.mxu0 0.0
    %1736 = vmatpush1.msra.mxu0 %v1582
    %1737 = vmatprep.subr.mxu0 0.0
    %1738 = vmatpush1.msra.mxu0 %v1583
    %1739 = vmatprep.subr.mxu0 0.0
    %1740 = vmatpush1.msra.mxu0 %v1584
    %1741 = vmatprep.subr.mxu0 0.0
    %1742 = vmatpush1.msra.mxu0 %v1585
    %1743 = vmatprep.subr.mxu0 0.0
    %1744 = vmatpush1.msra.mxu0 %v1586
    %1745 = vmatprep.subr.mxu0 0.0
    %1746 = vmatpush1.msra.mxu0 %v1587
    %1747 = vmatprep.subr.mxu0 0.0
    %1748 = vmatpush1.msra.mxu0 %v1588
    %1749 = vmatprep.subr.mxu0 0.0
    %1750 = vmatpush1.msra.mxu0 %v1589
    %1751 = vmatprep.mubr.f32.mxu0 %v1612
    %1752 = vmatmul.mubr.f32.gmra.mrb[0].mxu0 %v1610
    %v1753 = vpop.f32.mrb[0].mxu0
    %v1754 = vadd.f32 %v1684, %v1753
    %v1755 = vpop.f32.mrb[0].mxu0
    %1756 = vdwg.mxu0
    %vm1757 = vcmask 58368
    %1758 = vst.msk [vmem:[#allocation6] sm:$0x3] %vm1757, %v1754
    // Predicated region
    $region46: #{tpu_custom_call.1} parent=1 // pred_check
      _
    $region47: #{tpu_custom_call.1} parent=1 // pred_check_branch
      %1760 = sbr.rel (0) target = $region49
    $region48: #{tpu_custom_call.1} parent=1 // pred_region
      %s1762 = ssub.s32 32, 32
      %1763 = vsyncadd [#allocation5], %s1762
      %s1765 = sshll.u32 [#allocation6], 4
      %s1766 = int_to_ptr.vmem [resolvable:$true] %s1765
      %1768 = dma.vmem_to_hbm [thread:$0]  %s1766, 32, %s10, [#allocation5]
    $region49: #{tpu_custom_call.1} parent=1 // pred_fallthru
      _
    // Predicated region
    $region50: #{tpu_custom_call.1} parent=1 // pred_check
      _
    $region51: #{tpu_custom_call.1} parent=1 // pred_check_branch
      %1770 = sbr.rel (0) target = $region53
    $region52: #{tpu_custom_call.1} parent=1 // pred_region
      %1771 = dma.done [#allocation5], 32
    $region53: #{tpu_custom_call.1} parent=1 // pred_fallthru
      _
    %1772 = vsyncpa [#allocation4], 1
    %1773 = vsyncpa [#allocation5], 1

</llo_original>
